<compile_context>
chip_gen: v7x
topology: tpu7x:2x2x1
jax: 0.10.0
libtpu: 0.0.40
codegen_flags: <defaults>
</compile_context>

<pallas_src>
import functools

import jax
import jax.numpy as jnp
from jax.experimental import pallas as pl
from jax.experimental.pallas import tpu as pltpu


def _block_diag(blocks):
    """Host-side block-diagonal assembly (avoids jax.scipy dependency)."""
    rows = sum(b.shape[0] for b in blocks)
    cols = sum(b.shape[1] for b in blocks)
    out = jnp.zeros((rows, cols), blocks[0].dtype)
    r = c = 0
    for b in blocks:
        out = out.at[r:r + b.shape[0], c:c + b.shape[1]].set(b)
        r += b.shape[0]
        c += b.shape[1]
    return out


def _kmeans_vq_kernel(x_ref, wblk_ref, gnw_ref, gnb_ref, m_ref, mt_ref,
                      eb_ref, ebt_ref, e2_ref, *out_refs,
                      groups, eps, with_ze):
    if with_ze:
        zq_ref, idx_ref, counts_ref, sqerr_ref, ze_ref = out_refs
    else:
        zq_ref, idx_ref, counts_ref, sqerr_ref = out_refs
        ze_ref = None

    x = x_ref[0]                                       # (T, C) storage dtype
    T, C = x.shape
    var_dim = C // groups
    vp = e2_ref.shape[-1] // groups                    # lane-padded codebook size

    # ---- grouped 1x1 conv: one lane-dense MXU matmul against a block-diagonal
    #      (C, C) weight (bf16 operands, f32 accumulation) -------------------
    ze = jnp.dot(x.astype(jnp.bfloat16), wblk_ref[...],
                 preferred_element_type=jnp.float32)           # (T, C) f32

    # ---- Fp32GroupNorm over (T, group-channels), all statistics in f32 -----
    # Group sums / reverse channel-broadcast are done with tiny matmuls against
    # the 0/1 group-membership matrix, avoiding lane-thin slicing of ze.
    inv_n = 1.0 / float(T * var_dim)
    colsum = jnp.sum(ze, axis=0, keepdims=True)                # (1, C)
    gmean = jnp.dot(colsum, m_ref[...],
                    preferred_element_type=jnp.float32) * inv_n    # (1, G)
    mean_row = jnp.dot(gmean, mt_ref[...],
                       preferred_element_type=jnp.float32)         # (1, C)
    zc = ze - mean_row
    gvar = jnp.dot(jnp.sum(zc * zc, axis=0, keepdims=True), m_ref[...],
                   preferred_element_type=jnp.float32) * inv_n     # (1, G)
    inv_row = jnp.dot(jax.lax.rsqrt(gvar + eps), mt_ref[...],
                      preferred_element_type=jnp.float32)          # (1, C)
    ze_n = zc * inv_row * gnw_ref[...] + gnb_ref[...]              # (T, C) f32

    if with_ze:
        ze_ref[0] = ze_n.astype(ze_ref.dtype)

    # ---- squared L2 distances to the lane-padded codebook ------------------
    # d2 = |e|^2 - 2<ze, e>; the |ze|^2 term is constant per (t, group) and
    # cannot change the within-group argmin, so it is dropped.  The inner
    # products for all groups are one matmul against the block-diag codebook.
    xe = jnp.dot(ze_n.astype(jnp.bfloat16), eb_ref[...],
                 preferred_element_type=jnp.float32)           # (T, G*Vp) f32
    d2 = e2_ref[...] - 2.0 * xe                                # (T, G*Vp)

    idx_cols = []
    onehot_cols = []
    count_rows = []
    for g in range(groups):                 # tiny static unroll; Vp % 128 == 0
        d2_g = d2[:, g * vp:(g + 1) * vp]                      # whole-vreg slice
        dmin = jnp.min(d2_g, axis=-1, keepdims=True)           # (T, 1)
        iota = jax.lax.broadcasted_iota(jnp.int32, (T, vp), 1)
        idx_g = jnp.min(jnp.where(d2_g <= dmin, iota, vp),
                        axis=-1, keepdims=True)                # (T, 1) first-min
        mask = iota == idx_g                                   # (T, Vp) one-hot
        idx_cols.append(idx_g)
        onehot_cols.append(mask.astype(jnp.bfloat16))
        count_rows.append(jnp.sum(mask.astype(jnp.float32), axis=0,
                                  keepdims=True))              # (1, Vp)

    onehot = jnp.concatenate(onehot_cols, axis=-1)             # (T, G*Vp) bf16

    # ---- codeword gather: one fused MXU matmul (block-diag codebook^T) -----
    zq = jnp.dot(onehot, ebt_ref[...],
                 preferred_element_type=jnp.float32)           # (T, C) f32

    diff = zq - ze_n
    zq_ref[0] = zq.astype(zq_ref.dtype)
    idx_ref[0] = jnp.concatenate(idx_cols, axis=-1)            # (T, G) int32
    counts_ref[0] = jnp.concatenate(count_rows, axis=0)        # (G, Vp) f32
    sqerr_ref[0] = jnp.reshape(jnp.sum(diff * diff), (1, 1))   # per-batch sum


def kmeans_vq_forward(x, conv_w, gn_w, gn_b, embedding, *,
                      groups, num_vars, combine_groups=False,
                      gamma=0.25, time_first=True, gn_eps=1e-5,
                      produce_targets=True, return_ze=False):
    """Forward pass of KmeansVectorQuantizer.

    x         : (B, T, C) if time_first else (B, C, T), C == dim == vq_dim
    conv_w    : (C, C//groups) PyTorch Conv1d(k=1, groups, bias=False) weight
    gn_w,gn_b : (C,) GroupNorm affine params
    embedding : (num_vars, num_groups, var_dim), num_groups = 1 if combine_groups
    """
    if not time_first:
        x = jnp.transpose(x, (0, 2, 1))             # wrapper-side layout plumbing
    B, T, C = x.shape
    assert C % groups == 0
    var_dim = C // groups
    V = num_vars
    vp = max(128, ((V + 127) // 128) * 128)          # lane-pad the codebook axis
    gvp = groups * vp

    # ---- codebook: expand, bf16-round, pad, and build block-diag matrices ----
    if combine_groups:
        emb = jnp.broadcast_to(embedding, (V, groups, var_dim))
    else:
        emb = embedding
    emb_g = jnp.transpose(emb, (1, 0, 2)).astype(jnp.float32)        # (G, V, Dv)
    emb_rounded = emb_g.astype(jnp.bfloat16).astype(jnp.float32)     # MXU values
    emb_pad = jnp.zeros((groups, vp, var_dim), jnp.float32)
    emb_pad = emb_pad.at[:, :V, :].set(emb_rounded)                  # (G, Vp, Dv)

    ebt = _block_diag([emb_pad[g] for g in range(groups)])           # (G*Vp, C)
    eb = ebt.T                                                       # (C, G*Vp)
    ebt = ebt.astype(jnp.bfloat16)
    eb = eb.astype(jnp.bfloat16)

    e2 = jnp.sum(jnp.square(emb_pad), axis=-1)                       # (G, Vp)
    e2 = jnp.where(jnp.arange(vp)[None, :] >= V, jnp.float32(1e30), e2)
    e2_row = e2.reshape(1, gvp).astype(jnp.float32)

    # ---- block-diagonal grouped-conv weight -------------------------------
    w3 = conv_w.astype(jnp.float32).reshape(groups, var_dim, var_dim)  # (G,o,i)
    wblk = _block_diag([w3[g].T for g in range(groups)]).astype(jnp.bfloat16)

    # ---- group-membership matrices for the GroupNorm statistics -----------
    m = jnp.repeat(jnp.eye(groups, dtype=jnp.float32), var_dim, axis=0)  # (C,G)
    mt = m.T                                                             # (G,C)

    gn_w2 = gn_w.reshape(1, C).astype(jnp.float32)
    gn_b2 = gn_b.reshape(1, C).astype(jnp.float32)

    out_dtype = x.dtype
    kernel = functools.partial(_kmeans_vq_kernel, groups=groups,
                               eps=gn_eps, with_ze=return_ze)

    out_shape = [
        jax.ShapeDtypeStruct((B, T, C), out_dtype),          # zq
        jax.ShapeDtypeStruct((B, T, groups), jnp.int32),     # idx (targets)
        jax.ShapeDtypeStruct((B, groups, vp), jnp.float32),  # per-batch counts
        jax.ShapeDtypeStruct((B, 1, 1), jnp.float32),        # per-batch sqerr
    ]
    out_specs = [
        pl.BlockSpec((1, T, C), lambda b: (b, 0, 0)),
        pl.BlockSpec((1, T, groups), lambda b: (b, 0, 0)),
        pl.BlockSpec((1, groups, vp), lambda b: (b, 0, 0)),
        pl.BlockSpec((1, 1, 1), lambda b: (b, 0, 0)),
    ]
    if return_ze:
        out_shape.append(jax.ShapeDtypeStruct((B, T, C), jnp.float32))
        out_specs.append(pl.BlockSpec((1, T, C), lambda b: (b, 0, 0)))

    in_specs = [
        pl.BlockSpec((1, T, C), lambda b: (b, 0, 0)),        # x
        pl.BlockSpec((C, C), lambda b: (0, 0)),              # block-diag conv W
        pl.BlockSpec((1, C), lambda b: (0, 0)),              # gn weight
        pl.BlockSpec((1, C), lambda b: (0, 0)),              # gn bias
        pl.BlockSpec((C, groups), lambda b: (0, 0)),         # group membership M
        pl.BlockSpec((groups, C), lambda b: (0, 0)),         # M^T
        pl.BlockSpec((C, gvp), lambda b: (0, 0)),            # block-diag codebook
        pl.BlockSpec((gvp, C), lambda b: (0, 0)),            # its transpose
        pl.BlockSpec((1, gvp), lambda b: (0, 0)),            # padded |e|^2 row
    ]

    # Scoped-VMEM budget (v5e default is only 16 MiB); keep under v7x's 64 MiB
    # physical VMEM.
    isz = jnp.dtype(out_dtype).itemsize
    blocks = T * C * 2 * isz + T * groups * 4 + groups * vp * 4 + 4
    weights = C * C * 2 + 2 * C * 4 + 2 * C * groups * 4 + 2 * C * gvp * 2 + gvp * 4
    temps = 4 * T * C * 4 + 2 * T * gvp * 4 + T * gvp * 2
    vmem_limit = int(2 * (blocks + weights) + temps) + (4 << 20)
    vmem_limit = min(max(vmem_limit, 32 << 20), 60 << 20)

    outs = pl.pallas_call(
        kernel,
        out_shape=tuple(out_shape),
        grid_spec=pltpu.PrefetchScalarGridSpec(
            num_scalar_prefetch=0,
            grid=(B,),
            in_specs=in_specs,
            out_specs=tuple(out_specs),
        ),
        compiler_params=pltpu.CompilerParams(
            dimension_semantics=("parallel",),   # per-batch outputs -> TC-shardable
            vmem_limit_bytes=vmem_limit),
    )(x, wblk, gn_w2, gn_b2, m, mt, eb, ebt, e2_row)

    if return_ze:
        zq, idx, counts, sqerr, ze_out = outs
    else:
        zq, idx, counts, sqerr = outs
        ze_out = None

    # --- tiny scalar epilogue (matches the PyTorch module) ---
    counts_gv = jnp.sum(counts, axis=0)[:, :V]                       # (G, V)
    hard_probs = counts_gv / jnp.float32(B * T)
    code_perplexity = jnp.sum(
        jnp.exp(-jnp.sum(hard_probs * jnp.log(hard_probs + 1e-7), axis=-1)))

    mse = jnp.sum(sqerr) / jnp.float32(B * C * T)
    latent_loss = mse          # MSE(zq, ze.detach())  (forward value)
    commitment_loss = mse      # MSE(ze, zq.detach())  (forward value)
    kmeans_loss = latent_loss + gamma * commitment_loss

    # straight-through: forward value of result["x"] is zq
    # TODO(synk): the straight-through gradient (_pass_grad) is a backward-pass
    # construct; only the forward value is reproduced here (set return_ze=True
    # to also emit ze for a custom-VJP wrapper).
    out_x = zq if time_first else jnp.transpose(zq, (0, 2, 1))

    result = {
        "num_vars": num_vars,
        "x": out_x,
        "code_perplexity": code_perplexity,
        "kmeans_loss": kmeans_loss,
    }
    if produce_targets:
        result["targets"] = idx
    if return_ze:
        result["ze"] = ze_out if time_first else jnp.transpose(ze_out, (0, 2, 1))
    return result


if __name__ == "__main__":
    # Small, module-consistent shapes: dim == vq_dim (required by ze.view(...))
    B, T = 2, 16
    dim = vq_dim = 32
    groups = 2
    num_vars = 8
    combine_groups = False
    gamma = 0.25

    key = jax.random.PRNGKey(0)
    k_x, k_w, k_e = jax.random.split(key, 3)

    # input in BxTxC (time_first=True)
    x = jax.random.normal(k_x, (B, T, dim), dtype=jnp.float32)

    # Conv1d(dim, dim, k=1, groups, bias=False) weight: (out=dim, in=dim//groups)
    conv_w = 0.1 * jax.random.normal(k_w, (dim, dim // groups), dtype=jnp.float32)

    # GroupNorm affine params (PyTorch default init: weight=1, bias=0)
    gn_w = jnp.ones((dim,), dtype=jnp.float32)
    gn_b = jnp.zeros((dim,), dtype=jnp.float32)

    # embedding: 0.01 * randn(num_vars, num_groups, var_dim)
    num_groups = 1 if combine_groups else groups
    embedding = 0.01 * jax.random.normal(
        k_e, (num_vars, num_groups, dim // groups), dtype=jnp.float32)

    result = kmeans_vq_forward(
        x, conv_w, gn_w, gn_b, embedding,
        groups=groups, num_vars=num_vars, combine_groups=combine_groups,
        gamma=gamma, time_first=True, produce_targets=True)

    jax.block_until_ready(result)

    assert result["x"].shape == (B, T, vq_dim)
    assert result["x"].dtype == x.dtype
    assert result["targets"].shape == (B, T, groups)
    assert result["targets"].dtype == jnp.int32
    assert result["kmeans_loss"].shape == ()
    assert result["code_perplexity"].shape == ()
    assert bool(jnp.all(result["targets"] >= 0))
    assert bool(jnp.all(result["targets"] < num_vars))
    print("KERNEL_OK")
</pallas_src>

<mosaic_0001>
module attributes {stable_mosaic.version = 11 : i64} {
  func.func @_kmeans_vq_kernel(%arg0: i32, %arg1: memref<1x16x32xf32, #tpu.memory_space<vmem>>, %arg2: memref<32x32xbf16, #tpu.memory_space<vmem>>, %arg3: memref<1x32xf32, #tpu.memory_space<vmem>>, %arg4: memref<1x32xf32, #tpu.memory_space<vmem>>, %arg5: memref<32x2xf32, #tpu.memory_space<vmem>>, %arg6: memref<2x32xf32, #tpu.memory_space<vmem>>, %arg7: memref<32x256xbf16, #tpu.memory_space<vmem>>, %arg8: memref<256x32xbf16, #tpu.memory_space<vmem>>, %arg9: memref<1x256xf32, #tpu.memory_space<vmem>>, %arg10: memref<1x16x32xf32, #tpu.memory_space<vmem>>, %arg11: memref<1x16x2xi32, #tpu.memory_space<vmem>>, %arg12: memref<1x2x128xf32, #tpu.memory_space<vmem>>, %arg13: memref<1x1x1xf32, #tpu.memory_space<vmem>>) attributes {dimension_semantics = [#tpu.dimension_semantics<parallel>], iteration_bounds = array<i64: 2>, scalar_prefetch = 0 : i64, scratch_operands = 0 : i64, tpu.core_type = #tpu.core_type<tc>, window_params = [{transform_indices = @transform_0, window_bounds = array<i64: 1, 16, 32>}, {pipeline_mode = #tpu.pipeline_mode<synchronous>, transform_indices = @transform_1, window_bounds = array<i64: 32, 32>}, {pipeline_mode = #tpu.pipeline_mode<synchronous>, transform_indices = @transform_2, window_bounds = array<i64: 1, 32>}, {pipeline_mode = #tpu.pipeline_mode<synchronous>, transform_indices = @transform_3, window_bounds = array<i64: 1, 32>}, {pipeline_mode = #tpu.pipeline_mode<synchronous>, transform_indices = @transform_4, window_bounds = array<i64: 32, 2>}, {pipeline_mode = #tpu.pipeline_mode<synchronous>, transform_indices = @transform_5, window_bounds = array<i64: 2, 32>}, {pipeline_mode = #tpu.pipeline_mode<synchronous>, transform_indices = @transform_6, window_bounds = array<i64: 32, 256>}, {pipeline_mode = #tpu.pipeline_mode<synchronous>, transform_indices = @transform_7, window_bounds = array<i64: 256, 32>}, {pipeline_mode = #tpu.pipeline_mode<synchronous>, transform_indices = @transform_8, window_bounds = array<i64: 1, 256>}, {transform_indices = @transform_9, window_bounds = array<i64: 1, 16, 32>}, {transform_indices = @transform_10, window_bounds = array<i64: 1, 16, 2>}, {transform_indices = @transform_11, window_bounds = array<i64: 1, 2, 128>}, {transform_indices = @transform_12, window_bounds = array<i64: 1, 1, 1>}]} {
    %c0 = arith.constant 0 : index
    %c0_0 = arith.constant 0 : index
    %c0_1 = arith.constant 0 : index
    %0 = vector.load %arg1[%c0, %c0_0, %c0_1] : memref<1x16x32xf32, #tpu.memory_space<vmem>>, vector<1x16x32xf32>
    %1 = vector.shape_cast %0 : vector<1x16x32xf32> to vector<16x32xf32>
    %2 = arith.truncf %1 : vector<16x32xf32> to vector<16x32xbf16>
    %c0_2 = arith.constant 0 : index
    %c0_3 = arith.constant 0 : index
    %3 = vector.load %arg2[%c0_2, %c0_3] : memref<32x32xbf16, #tpu.memory_space<vmem>>, vector<32x32xbf16>
    %cst = arith.constant dense<0.000000e+00> : vector<16x32xf32>
    %4 = tpu.matmul %2, %3, %cst {dimension_numbers = #tpu.dot_dimension_numbers<[1], [0], [0], [1], [0, 0, 1, 1], [], []>} : vector<16x32xbf16>, vector<32x32xbf16>, vector<16x32xf32> -> vector<16x32xf32>
    %cst_4 = arith.constant dense<0.000000e+00> : vector<32xf32>
    %5 = vector.multi_reduction <add>, %4, %cst_4 [0] : vector<16x32xf32> to vector<32xf32>
    %6 = vector.shape_cast %5 : vector<32xf32> to vector<1x32xf32>
    %c0_5 = arith.constant 0 : index
    %c0_6 = arith.constant 0 : index
    %7 = vector.load %arg5[%c0_5, %c0_6] : memref<32x2xf32, #tpu.memory_space<vmem>>, vector<32x2xf32>
    %cst_7 = arith.constant dense<0.000000e+00> : vector<1x2xf32>
    %8 = tpu.matmul %6, %7, %cst_7 {dimension_numbers = #tpu.dot_dimension_numbers<[1], [0], [0], [1], [0, 0, 1, 1], [], []>} : vector<1x32xf32>, vector<32x2xf32>, vector<1x2xf32> -> vector<1x2xf32>
    %cst_8 = arith.constant 3.906250e-03 : f32
    %9 = vector.broadcast %cst_8 : f32 to vector<1x2xf32>
    %10 = arith.mulf %8, %9 : vector<1x2xf32>
    %c0_9 = arith.constant 0 : index
    %c0_10 = arith.constant 0 : index
    %11 = vector.load %arg6[%c0_9, %c0_10] : memref<2x32xf32, #tpu.memory_space<vmem>>, vector<2x32xf32>
    %cst_11 = arith.constant dense<0.000000e+00> : vector<1x32xf32>
    %12 = tpu.matmul %10, %11, %cst_11 {dimension_numbers = #tpu.dot_dimension_numbers<[1], [0], [0], [1], [0, 0, 1, 1], [], []>} : vector<1x2xf32>, vector<2x32xf32>, vector<1x32xf32> -> vector<1x32xf32>
    %13 = vector.broadcast %12 : vector<1x32xf32> to vector<16x32xf32>
    %14 = arith.subf %4, %13 : vector<16x32xf32>
    %15 = arith.mulf %14, %14 : vector<16x32xf32>
    %cst_12 = arith.constant dense<0.000000e+00> : vector<32xf32>
    %16 = vector.multi_reduction <add>, %15, %cst_12 [0] : vector<16x32xf32> to vector<32xf32>
    %17 = vector.shape_cast %16 : vector<32xf32> to vector<1x32xf32>
    %c0_13 = arith.constant 0 : index
    %c0_14 = arith.constant 0 : index
    %18 = vector.load %arg5[%c0_13, %c0_14] : memref<32x2xf32, #tpu.memory_space<vmem>>, vector<32x2xf32>
    %cst_15 = arith.constant dense<0.000000e+00> : vector<1x2xf32>
    %19 = tpu.matmul %17, %18, %cst_15 {dimension_numbers = #tpu.dot_dimension_numbers<[1], [0], [0], [1], [0, 0, 1, 1], [], []>} : vector<1x32xf32>, vector<32x2xf32>, vector<1x2xf32> -> vector<1x2xf32>
    %cst_16 = arith.constant 3.906250e-03 : f32
    %20 = vector.broadcast %cst_16 : f32 to vector<1x2xf32>
    %21 = arith.mulf %19, %20 : vector<1x2xf32>
    %cst_17 = arith.constant 9.99999974E-6 : f32
    %22 = vector.broadcast %cst_17 : f32 to vector<1x2xf32>
    %23 = arith.addf %21, %22 : vector<1x2xf32>
    %24 = math.rsqrt %23 : vector<1x2xf32>
    %c0_18 = arith.constant 0 : index
    %c0_19 = arith.constant 0 : index
    %25 = vector.load %arg6[%c0_18, %c0_19] : memref<2x32xf32, #tpu.memory_space<vmem>>, vector<2x32xf32>
    %cst_20 = arith.constant dense<0.000000e+00> : vector<1x32xf32>
    %26 = tpu.matmul %24, %25, %cst_20 {dimension_numbers = #tpu.dot_dimension_numbers<[1], [0], [0], [1], [0, 0, 1, 1], [], []>} : vector<1x2xf32>, vector<2x32xf32>, vector<1x32xf32> -> vector<1x32xf32>
    %27 = vector.broadcast %26 : vector<1x32xf32> to vector<16x32xf32>
    %28 = arith.mulf %14, %27 : vector<16x32xf32>
    %c0_21 = arith.constant 0 : index
    %c0_22 = arith.constant 0 : index
    %29 = vector.load %arg3[%c0_21, %c0_22] : memref<1x32xf32, #tpu.memory_space<vmem>>, vector<1x32xf32>
    %30 = vector.broadcast %29 : vector<1x32xf32> to vector<16x32xf32>
    %31 = arith.mulf %28, %30 : vector<16x32xf32>
    %c0_23 = arith.constant 0 : index
    %c0_24 = arith.constant 0 : index
    %32 = vector.load %arg4[%c0_23, %c0_24] : memref<1x32xf32, #tpu.memory_space<vmem>>, vector<1x32xf32>
    %33 = vector.broadcast %32 : vector<1x32xf32> to vector<16x32xf32>
    %34 = arith.addf %31, %33 : vector<16x32xf32>
    %35 = arith.truncf %34 : vector<16x32xf32> to vector<16x32xbf16>
    %c0_25 = arith.constant 0 : index
    %c0_26 = arith.constant 0 : index
    %36 = vector.load %arg7[%c0_25, %c0_26] : memref<32x256xbf16, #tpu.memory_space<vmem>>, vector<32x256xbf16>
    %cst_27 = arith.constant dense<0.000000e+00> : vector<16x256xf32>
    %37 = tpu.matmul %35, %36, %cst_27 {dimension_numbers = #tpu.dot_dimension_numbers<[1], [0], [0], [1], [0, 0, 1, 1], [], []>} : vector<16x32xbf16>, vector<32x256xbf16>, vector<16x256xf32> -> vector<16x256xf32>
    %c0_28 = arith.constant 0 : index
    %c0_29 = arith.constant 0 : index
    %38 = vector.load %arg9[%c0_28, %c0_29] : memref<1x256xf32, #tpu.memory_space<vmem>>, vector<1x256xf32>
    %cst_30 = arith.constant 2.000000e+00 : f32
    %39 = vector.broadcast %cst_30 : f32 to vector<16x256xf32>
    %40 = arith.mulf %39, %37 : vector<16x256xf32>
    %41 = vector.broadcast %38 : vector<1x256xf32> to vector<16x256xf32>
    %42 = arith.subf %41, %40 : vector<16x256xf32>
    %43 = vector.extract_strided_slice %42 {offsets = [0, 0], sizes = [16, 128], strides = [1, 1]} : vector<16x256xf32> to vector<16x128xf32>
    %cst_31 = arith.constant dense<0x7F800000> : vector<16xf32>
    %44 = vector.multi_reduction <minimumf>, %43, %cst_31 [1] : vector<16x128xf32> to vector<16xf32>
    %45 = vector.shape_cast %44 : vector<16xf32> to vector<16x1xf32>
    %46 = tpu.iota {dimensions = array<i32: 1>} : vector<16x128xi32>
    %47 = vector.broadcast %45 : vector<16x1xf32> to vector<16x128xf32>
    %48 = arith.cmpf ole, %43, %47 : vector<16x128xf32>
    %c128_i32 = arith.constant 128 : i32
    %49 = vector.broadcast %c128_i32 : i32 to vector<16x128xi32>
    %50 = arith.select %48, %46, %49 : vector<16x128xi1>, vector<16x128xi32>
    %cst_32 = arith.constant dense<2147483647> : vector<16xi32>
    %51 = vector.multi_reduction <minsi>, %50, %cst_32 [1] : vector<16x128xi32> to vector<16xi32>
    %52 = vector.shape_cast %51 : vector<16xi32> to vector<16x1xi32>
    %53 = vector.broadcast %52 : vector<16x1xi32> to vector<16x128xi32>
    %54 = arith.cmpi eq, %46, %53 : vector<16x128xi32>
    %55 = arith.extui %54 : vector<16x128xi1> to vector<16x128xi32>
    %56 = arith.sitofp %55 : vector<16x128xi32> to vector<16x128xf32>
    %57 = arith.truncf %56 : vector<16x128xf32> to vector<16x128xbf16>
    %58 = arith.extui %54 : vector<16x128xi1> to vector<16x128xi32>
    %59 = arith.sitofp %58 : vector<16x128xi32> to vector<16x128xf32>
    %cst_33 = arith.constant dense<0.000000e+00> : vector<128xf32>
    %60 = vector.multi_reduction <add>, %59, %cst_33 [0] : vector<16x128xf32> to vector<128xf32>
    %61 = vector.shape_cast %60 : vector<128xf32> to vector<1x128xf32>
    %62 = vector.extract_strided_slice %42 {offsets = [0, 128], sizes = [16, 128], strides = [1, 1]} : vector<16x256xf32> to vector<16x128xf32>
    %cst_34 = arith.constant dense<0x7F800000> : vector<16xf32>
    %63 = vector.multi_reduction <minimumf>, %62, %cst_34 [1] : vector<16x128xf32> to vector<16xf32>
    %64 = vector.shape_cast %63 : vector<16xf32> to vector<16x1xf32>
    %65 = tpu.iota {dimensions = array<i32: 1>} : vector<16x128xi32>
    %66 = vector.broadcast %64 : vector<16x1xf32> to vector<16x128xf32>
    %67 = arith.cmpf ole, %62, %66 : vector<16x128xf32>
    %c128_i32_35 = arith.constant 128 : i32
    %68 = vector.broadcast %c128_i32_35 : i32 to vector<16x128xi32>
    %69 = arith.select %67, %65, %68 : vector<16x128xi1>, vector<16x128xi32>
    %cst_36 = arith.constant dense<2147483647> : vector<16xi32>
    %70 = vector.multi_reduction <minsi>, %69, %cst_36 [1] : vector<16x128xi32> to vector<16xi32>
    %71 = vector.shape_cast %70 : vector<16xi32> to vector<16x1xi32>
    %72 = vector.broadcast %71 : vector<16x1xi32> to vector<16x128xi32>
    %73 = arith.cmpi eq, %65, %72 : vector<16x128xi32>
    %74 = arith.extui %73 : vector<16x128xi1> to vector<16x128xi32>
    %75 = arith.sitofp %74 : vector<16x128xi32> to vector<16x128xf32>
    %76 = arith.truncf %75 : vector<16x128xf32> to vector<16x128xbf16>
    %77 = arith.extui %73 : vector<16x128xi1> to vector<16x128xi32>
    %78 = arith.sitofp %77 : vector<16x128xi32> to vector<16x128xf32>
    %cst_37 = arith.constant dense<0.000000e+00> : vector<128xf32>
    %79 = vector.multi_reduction <add>, %78, %cst_37 [0] : vector<16x128xf32> to vector<128xf32>
    %80 = vector.shape_cast %79 : vector<128xf32> to vector<1x128xf32>
    %81 = tpu.concatenate %57, %76 in 1 : vector<16x128xbf16>, vector<16x128xbf16> -> vector<16x256xbf16>
    %c0_38 = arith.constant 0 : index
    %c0_39 = arith.constant 0 : index
    %82 = vector.load %arg8[%c0_38, %c0_39] : memref<256x32xbf16, #tpu.memory_space<vmem>>, vector<256x32xbf16>
    %cst_40 = arith.constant dense<0.000000e+00> : vector<16x32xf32>
    %83 = tpu.matmul %81, %82, %cst_40 {dimension_numbers = #tpu.dot_dimension_numbers<[1], [0], [0], [1], [0, 0, 1, 1], [], []>} : vector<16x256xbf16>, vector<256x32xbf16>, vector<16x32xf32> -> vector<16x32xf32>
    %84 = arith.subf %83, %34 : vector<16x32xf32>
    %c0_41 = arith.constant 0 : index
    %c0_42 = arith.constant 0 : index
    %c0_43 = arith.constant 0 : index
    %85 = vector.load %arg10[%c0_41, %c0_42, %c0_43] : memref<1x16x32xf32, #tpu.memory_space<vmem>>, vector<1x16x32xf32>
    %86 = vector.shape_cast %85 : vector<1x16x32xf32> to vector<16x32xf32>
    %87 = vector.shape_cast %83 : vector<16x32xf32> to vector<1x16x32xf32>
    tpu.vector_store %arg10[%c0_41, %c0_42, %c0_43], %87 {strides = array<i32>} : memref<1x16x32xf32, #tpu.memory_space<vmem>>, vector<1x16x32xf32>,
    %88 = tpu.concatenate %52, %71 in 1 : vector<16x1xi32>, vector<16x1xi32> -> vector<16x2xi32>
    %c0_44 = arith.constant 0 : index
    %c0_45 = arith.constant 0 : index
    %c0_46 = arith.constant 0 : index
    %89 = vector.load %arg11[%c0_44, %c0_45, %c0_46] : memref<1x16x2xi32, #tpu.memory_space<vmem>>, vector<1x16x2xi32>
    %90 = vector.shape_cast %89 : vector<1x16x2xi32> to vector<16x2xi32>
    %91 = vector.shape_cast %88 : vector<16x2xi32> to vector<1x16x2xi32>
    tpu.vector_store %arg11[%c0_44, %c0_45, %c0_46], %91 {strides = array<i32>} : memref<1x16x2xi32, #tpu.memory_space<vmem>>, vector<1x16x2xi32>,
    %92 = tpu.concatenate %61, %80 in 0 : vector<1x128xf32>, vector<1x128xf32> -> vector<2x128xf32>
    %c0_47 = arith.constant 0 : index
    %c0_48 = arith.constant 0 : index
    %c0_49 = arith.constant 0 : index
    %93 = vector.load %arg12[%c0_47, %c0_48, %c0_49] : memref<1x2x128xf32, #tpu.memory_space<vmem>>, vector<1x2x128xf32>
    %94 = vector.shape_cast %93 : vector<1x2x128xf32> to vector<2x128xf32>
    %95 = vector.shape_cast %92 : vector<2x128xf32> to vector<1x2x128xf32>
    tpu.vector_store %arg12[%c0_47, %c0_48, %c0_49], %95 {strides = array<i32>} : memref<1x2x128xf32, #tpu.memory_space<vmem>>, vector<1x2x128xf32>,
    %96 = arith.mulf %84, %84 : vector<16x32xf32>
    %97 = vector.shape_cast %96 : vector<16x32xf32> to vector<1x16x32xf32>
    %cst_50 = arith.constant dense<0.000000e+00> : vector<1xf32>
    %98 = vector.multi_reduction <add>, %97, %cst_50 [1, 2] : vector<1x16x32xf32> to vector<1xf32>
    %99 = vector.shape_cast %98 : vector<1xf32> to vector<1x1x1xf32>
    %100 = vector.extract %99[0, 0, 0] : f32 from vector<1x1x1xf32>
    %101 = vector.broadcast %100 : f32 to vector<1x1xf32>
    %c0_51 = arith.constant 0 : index
    %c0_52 = arith.constant 0 : index
    %c0_53 = arith.constant 0 : index
    %102 = vector.load %arg13[%c0_51, %c0_52, %c0_53] : memref<1x1x1xf32, #tpu.memory_space<vmem>>, vector<1x1x1xf32>
    %103 = vector.shape_cast %102 : vector<1x1x1xf32> to vector<1x1xf32>
    %104 = vector.shape_cast %101 : vector<1x1xf32> to vector<1x1x1xf32>
    tpu.vector_store %arg13[%c0_51, %c0_52, %c0_53], %104 {strides = array<i32>} : memref<1x1x1xf32, #tpu.memory_space<vmem>>, vector<1x1x1xf32>,
    return
  }
  func.func @transform_0(%arg0: i32) -> (i32, i32, i32) {
    %c0_i32 = arith.constant 0 : i32
    %c0_i32_0 = arith.constant 0 : i32
    %c0_i32_1 = arith.constant 0 : i32
    return %arg0, %c0_i32, %c0_i32_0 : i32, i32, i32
  }
  func.func @transform_1(%arg0: i32) -> (i32, i32) {
    %c0_i32 = arith.constant 0 : i32
    %c0_i32_0 = arith.constant 0 : i32
    %c0_i32_1 = arith.constant 0 : i32
    return %c0_i32, %c0_i32_0 : i32, i32
  }
  func.func @transform_2(%arg0: i32) -> (i32, i32) {
    %c0_i32 = arith.constant 0 : i32
    %c0_i32_0 = arith.constant 0 : i32
    %c0_i32_1 = arith.constant 0 : i32
    return %c0_i32, %c0_i32_0 : i32, i32
  }
  func.func @transform_3(%arg0: i32) -> (i32, i32) {
    %c0_i32 = arith.constant 0 : i32
    %c0_i32_0 = arith.constant 0 : i32
    %c0_i32_1 = arith.constant 0 : i32
    return %c0_i32, %c0_i32_0 : i32, i32
  }
  func.func @transform_4(%arg0: i32) -> (i32, i32) {
    %c0_i32 = arith.constant 0 : i32
    %c0_i32_0 = arith.constant 0 : i32
    %c0_i32_1 = arith.constant 0 : i32
    return %c0_i32, %c0_i32_0 : i32, i32
  }
  func.func @transform_5(%arg0: i32) -> (i32, i32) {
    %c0_i32 = arith.constant 0 : i32
    %c0_i32_0 = arith.constant 0 : i32
    %c0_i32_1 = arith.constant 0 : i32
    return %c0_i32, %c0_i32_0 : i32, i32
  }
  func.func @transform_6(%arg0: i32) -> (i32, i32) {
    %c0_i32 = arith.constant 0 : i32
    %c0_i32_0 = arith.constant 0 : i32
    %c0_i32_1 = arith.constant 0 : i32
    return %c0_i32, %c0_i32_0 : i32, i32
  }
  func.func @transform_7(%arg0: i32) -> (i32, i32) {
    %c0_i32 = arith.constant 0 : i32
    %c0_i32_0 = arith.constant 0 : i32
    %c0_i32_1 = arith.constant 0 : i32
    return %c0_i32, %c0_i32_0 : i32, i32
  }
  func.func @transform_8(%arg0: i32) -> (i32, i32) {
    %c0_i32 = arith.constant 0 : i32
    %c0_i32_0 = arith.constant 0 : i32
    %c0_i32_1 = arith.constant 0 : i32
    return %c0_i32, %c0_i32_0 : i32, i32
  }
  func.func @transform_9(%arg0: i32) -> (i32, i32, i32) {
    %c0_i32 = arith.constant 0 : i32
    %c0_i32_0 = arith.constant 0 : i32
    %c0_i32_1 = arith.constant 0 : i32
    return %arg0, %c0_i32, %c0_i32_0 : i32, i32, i32
  }
  func.func @transform_10(%arg0: i32) -> (i32, i32, i32) {
    %c0_i32 = arith.constant 0 : i32
    %c0_i32_0 = arith.constant 0 : i32
    %c0_i32_1 = arith.constant 0 : i32
    return %arg0, %c0_i32, %c0_i32_0 : i32, i32, i32
  }
  func.func @transform_11(%arg0: i32) -> (i32, i32, i32) {
    %c0_i32 = arith.constant 0 : i32
    %c0_i32_0 = arith.constant 0 : i32
    %c0_i32_1 = arith.constant 0 : i32
    return %arg0, %c0_i32, %c0_i32_0 : i32, i32, i32
  }
  func.func @transform_12(%arg0: i32) -> (i32, i32, i32) {
    %c0_i32 = arith.constant 0 : i32
    %c0_i32_0 = arith.constant 0 : i32
    %c0_i32_1 = arith.constant 0 : i32
    return %arg0, %c0_i32, %c0_i32_0 : i32, i32, i32
  }
}

</mosaic_0001>

<llo_original>
// kernel: tpu_custom_call.1
$region0: #{tpu_custom_call.1}
  #allocation0 [shape = 'u32[]', space=smem, size = 0x4, offset = 0x4, fixed_abs, tag = 'smem constant byte address 0x4 - core index']
  #allocation1 [shape = 'u32[144,128]{1,0:T(1,128)}', space=vmem, size = 0x12000, scoped, tag = 'internal scratch']
  %s0 = inlined_call_operand.vmem [shape: f32[2,16,32], index: 0, kind: input, shape index: {}]
  %s1 = inlined_call_operand.vmem [shape: bf16[32,32], index: 1, kind: input, shape index: {}]
  %s2 = inlined_call_operand.vmem [shape: f32[1,32], index: 2, kind: input, shape index: {}]
  %s3 = inlined_call_operand.vmem [shape: f32[1,32], index: 3, kind: input, shape index: {}]
  %s4 = inlined_call_operand.vmem [shape: f32[32,2], index: 4, kind: input, shape index: {}]
  %s5 = inlined_call_operand.vmem [shape: f32[2,32], index: 5, kind: input, shape index: {}]
  %s6 = inlined_call_operand.vmem [shape: bf16[32,256], index: 6, kind: input, shape index: {}]
  %s7 = inlined_call_operand.vmem [shape: bf16[256,32], index: 7, kind: input, shape index: {}]
  %s8 = inlined_call_operand.vmem [shape: f32[1,256], index: 8, kind: input, shape index: {}]
  %s9 = inlined_call_operand.hbm [shape: f32[2,16,32], index: 9, kind: output, shape index: {0}]
  %s10 = inlined_call_operand.vmem [shape: s32[2,16,2], index: 10, kind: output, shape index: {1}]
  %s11 = inlined_call_operand.hbm [shape: f32[2,2,128], index: 11, kind: output, shape index: {2}]
  %s12 = inlined_call_operand.vmem [shape: f32[2,1,1], index: 12, kind: output, shape index: {3}]
  %13 = xla_tuple %s9, %s10, %s11, %s12
  %s14 = sld [smem:[#allocation0]]
  $region93: #{tpu_custom_call.1} parent=0
    _
  %s16 = ssub.s32 1, %s14
  %s17 = scalar_select 0, %s16, %s14
  $region1: #{tpu_custom_call.1} parent=0
    #allocation2 [shape = 'u8[16384]{0}', space=vmem, size = 0x4000, scoped, tag = 'output window, operand 0']
    #allocation3 [shape = 's32[2]{0}', space=sflag, size = 0x8, scoped, tag = 'scoped memory for tpu_custom_call.1']
    #allocation4 [shape = 'u8[2048]{0}', space=vmem, size = 0x800, scoped, tag = 'output window, operand 2']
    #allocation5 [shape = 's32[2]{0}', space=sflag, size = 0x8, scoped, tag = 'scoped memory for tpu_custom_call.1']
    %18 = vsyncpa [#allocation3], 0
    %s19 = scalar_lea.sflag [#allocation3], 1
    %20 = vsyncpa %s19, 0
    %21 = vsyncpa [#allocation5], 0
    %s22 = scalar_lea.sflag [#allocation5], 1
    %23 = vsyncpa %s22, 0
    loop: start=0, step=1, limit=4
    $region2: #{tpu_custom_call.1} parent=1 // loop_pre_header
      _
    $region3: #{tpu_custom_call.1} parent=1 // loop_header
      %s25 = sphi 0, %s29
      %p26 = scmp.ge.s32.totalorder %s25, 4
      %s35 = sphi 0, %s37
      %s38 = sphi 0, %s35
      %s39 = sphi 0, %s38
      %s55 = sphi 0, %s39
      %s59 = sphi 0, %s59
      %s61 = sphi 0, %s59
      %s62 = sphi 0, %s61
      %s76 = sphi 0, %s62
      %s80 = sphi 0, %s80
      %s82 = sphi 0, %s80
      %s83 = sphi 0, %s82
      %s97 = sphi 0, %s83
      %s101 = sphi 0, %s101
      %s103 = sphi 0, %s101
      %s104 = sphi 0, %s103
      %s118 = sphi 0, %s104
      %s122 = sphi 0, %s122
      %s124 = sphi 0, %s122
      %s125 = sphi 0, %s124
      %s139 = sphi 0, %s125
      %s143 = sphi 0, %s143
      %s145 = sphi 0, %s143
      %s146 = sphi 0, %s145
      %s160 = sphi 0, %s146
      %s164 = sphi 0, %s164
      %s166 = sphi 0, %s164
      %s167 = sphi 0, %s166
      %s181 = sphi 0, %s167
      %s185 = sphi 0, %s185
      %s187 = sphi 0, %s185
      %s188 = sphi 0, %s187
      %s202 = sphi 0, %s188
      %s206 = sphi 0, %s206
      %s208 = sphi 0, %s206
      %s209 = sphi 0, %s208
      %s223 = sphi 0, %s209
      %s229 = sphi 0, %s231
      %s232 = sphi 0, %s229
      %s233 = sphi 0, %s232
      %s249 = sphi 0, %s233
      %s255 = sphi 0, %s257
      %s258 = sphi 0, %s255
      %s259 = sphi 0, %s258
      %s275 = sphi 0, %s259
      %s281 = sphi 0, %s283
      %s284 = sphi 0, %s281
      %s285 = sphi 0, %s284
      %s301 = sphi 0, %s285
      %s307 = sphi 0, %s309
      %s310 = sphi 0, %s307
      %s311 = sphi 0, %s310
      %s327 = sphi 0, %s311
    $region4: #{tpu_custom_call.1} parent=1 // loop_header_branch
      %28 = sbr.rel (%p26) target = $region8
    $region5: #{tpu_custom_call.1} parent=1 // loop_body
      %s30 = ssub.s32 %s25, 1
      %s31 = ssub.s32 %s25, 2
      %s32 = sadd.s32 %s25, 1
      %s33 = ssub.s32 %s25, %s32
      %p34 = scmp.eq.s32.totalorder %s33, 0
      %s36 = sadd.s32 %s35, 1
      %s37 = scalar_select %p34, %s35, %s36
      %p40 = pneg %p34
      %p41 = scmp.eq.s32.totalorder %s25, 1
      %p42 = por %p40, %p41
      %p43 = scmp.ne.s32.totalorder %s35, %s38
      %p44 = scmp.eq.s32.totalorder %s25, 0
      %p45 = por %p43, %p44
      %p46 = scmp.ne.s32.totalorder %s35, %s38
      %p47 = scmp.eq.s32.totalorder %s30, 1
      %p48 = por %p46, %p47
      %p49 = scmp.ne.s32.totalorder %s38, %s39
      %p50 = scmp.eq.s32.totalorder %s30, 0
      %p51 = por %p49, %p50
      %p52 = scmp.ne.s32.totalorder %s38, %s39
      %p53 = scmp.eq.s32.totalorder %s31, 1
      %p54 = por %p52, %p53
      %p56 = scmp.ne.s32.totalorder %s39, %s55
      %p57 = scmp.eq.s32.totalorder %s31, 0
      %p58 = por %p56, %p57
      %s60 = sadd.s32 %s59, 1
      %p63 = scmp.eq.s32.totalorder %s25, 1
      %p64 = scmp.ne.s32.totalorder %s59, %s61
      %p65 = scmp.eq.s32.totalorder %s25, 0
      %p66 = por %p64, %p65
      %p67 = scmp.ne.s32.totalorder %s59, %s61
      %p68 = scmp.eq.s32.totalorder %s30, 1
      %p69 = por %p67, %p68
      %p70 = scmp.ne.s32.totalorder %s61, %s62
      %p71 = scmp.eq.s32.totalorder %s30, 0
      %p72 = por %p70, %p71
      %p73 = scmp.ne.s32.totalorder %s61, %s62
      %p74 = scmp.eq.s32.totalorder %s31, 1
      %p75 = por %p73, %p74
      %p77 = scmp.ne.s32.totalorder %s62, %s76
      %p78 = scmp.eq.s32.totalorder %s31, 0
      %p79 = por %p77, %p78
      %s81 = sadd.s32 %s80, 1
      %p84 = scmp.eq.s32.totalorder %s25, 1
      %p85 = scmp.ne.s32.totalorder %s80, %s82
      %p86 = scmp.eq.s32.totalorder %s25, 0
      %p87 = por %p85, %p86
      %p88 = scmp.ne.s32.totalorder %s80, %s82
      %p89 = scmp.eq.s32.totalorder %s30, 1
      %p90 = por %p88, %p89
      %p91 = scmp.ne.s32.totalorder %s82, %s83
      %p92 = scmp.eq.s32.totalorder %s30, 0
      %p93 = por %p91, %p92
      %p94 = scmp.ne.s32.totalorder %s82, %s83
      %p95 = scmp.eq.s32.totalorder %s31, 1
      %p96 = por %p94, %p95
      %p98 = scmp.ne.s32.totalorder %s83, %s97
      %p99 = scmp.eq.s32.totalorder %s31, 0
      %p100 = por %p98, %p99
      %s102 = sadd.s32 %s101, 1
      %p105 = scmp.eq.s32.totalorder %s25, 1
      %p106 = scmp.ne.s32.totalorder %s101, %s103
      %p107 = scmp.eq.s32.totalorder %s25, 0
      %p108 = por %p106, %p107
      %p109 = scmp.ne.s32.totalorder %s101, %s103
      %p110 = scmp.eq.s32.totalorder %s30, 1
      %p111 = por %p109, %p110
      %p112 = scmp.ne.s32.totalorder %s103, %s104
      %p113 = scmp.eq.s32.totalorder %s30, 0
      %p114 = por %p112, %p113
      %p115 = scmp.ne.s32.totalorder %s103, %s104
      %p116 = scmp.eq.s32.totalorder %s31, 1
      %p117 = por %p115, %p116
      %p119 = scmp.ne.s32.totalorder %s104, %s118
      %p120 = scmp.eq.s32.totalorder %s31, 0
      %p121 = por %p119, %p120
      %s123 = sadd.s32 %s122, 1
      %p126 = scmp.eq.s32.totalorder %s25, 1
      %p127 = scmp.ne.s32.totalorder %s122, %s124
      %p128 = scmp.eq.s32.totalorder %s25, 0
      %p129 = por %p127, %p128
      %p130 = scmp.ne.s32.totalorder %s122, %s124
      %p131 = scmp.eq.s32.totalorder %s30, 1
      %p132 = por %p130, %p131
      %p133 = scmp.ne.s32.totalorder %s124, %s125
      %p134 = scmp.eq.s32.totalorder %s30, 0
      %p135 = por %p133, %p134
      %p136 = scmp.ne.s32.totalorder %s124, %s125
      %p137 = scmp.eq.s32.totalorder %s31, 1
      %p138 = por %p136, %p137
      %p140 = scmp.ne.s32.totalorder %s125, %s139
      %p141 = scmp.eq.s32.totalorder %s31, 0
      %p142 = por %p140, %p141
      %s144 = sadd.s32 %s143, 1
      %p147 = scmp.eq.s32.totalorder %s25, 1
      %p148 = scmp.ne.s32.totalorder %s143, %s145
      %p149 = scmp.eq.s32.totalorder %s25, 0
      %p150 = por %p148, %p149
      %p151 = scmp.ne.s32.totalorder %s143, %s145
      %p152 = scmp.eq.s32.totalorder %s30, 1
      %p153 = por %p151, %p152
      %p154 = scmp.ne.s32.totalorder %s145, %s146
      %p155 = scmp.eq.s32.totalorder %s30, 0
      %p156 = por %p154, %p155
      %p157 = scmp.ne.s32.totalorder %s145, %s146
      %p158 = scmp.eq.s32.totalorder %s31, 1
      %p159 = por %p157, %p158
      %p161 = scmp.ne.s32.totalorder %s146, %s160
      %p162 = scmp.eq.s32.totalorder %s31, 0
      %p163 = por %p161, %p162
      %s165 = sadd.s32 %s164, 1
      %p168 = scmp.eq.s32.totalorder %s25, 1
      %p169 = scmp.ne.s32.totalorder %s164, %s166
      %p170 = scmp.eq.s32.totalorder %s25, 0
      %p171 = por %p169, %p170
      %p172 = scmp.ne.s32.totalorder %s164, %s166
      %p173 = scmp.eq.s32.totalorder %s30, 1
      %p174 = por %p172, %p173
      %p175 = scmp.ne.s32.totalorder %s166, %s167
      %p176 = scmp.eq.s32.totalorder %s30, 0
      %p177 = por %p175, %p176
      %p178 = scmp.ne.s32.totalorder %s166, %s167
      %p179 = scmp.eq.s32.totalorder %s31, 1
      %p180 = por %p178, %p179
      %p182 = scmp.ne.s32.totalorder %s167, %s181
      %p183 = scmp.eq.s32.totalorder %s31, 0
      %p184 = por %p182, %p183
      %s186 = sadd.s32 %s185, 1
      %p189 = scmp.eq.s32.totalorder %s25, 1
      %p190 = scmp.ne.s32.totalorder %s185, %s187
      %p191 = scmp.eq.s32.totalorder %s25, 0
      %p192 = por %p190, %p191
      %p193 = scmp.ne.s32.totalorder %s185, %s187
      %p194 = scmp.eq.s32.totalorder %s30, 1
      %p195 = por %p193, %p194
      %p196 = scmp.ne.s32.totalorder %s187, %s188
      %p197 = scmp.eq.s32.totalorder %s30, 0
      %p198 = por %p196, %p197
      %p199 = scmp.ne.s32.totalorder %s187, %s188
      %p200 = scmp.eq.s32.totalorder %s31, 1
      %p201 = por %p199, %p200
      %p203 = scmp.ne.s32.totalorder %s188, %s202
      %p204 = scmp.eq.s32.totalorder %s31, 0
      %p205 = por %p203, %p204
      %s207 = sadd.s32 %s206, 1
      %p210 = scmp.eq.s32.totalorder %s25, 1
      %p211 = scmp.ne.s32.totalorder %s206, %s208
      %p212 = scmp.eq.s32.totalorder %s25, 0
      %p213 = por %p211, %p212
      %p214 = scmp.ne.s32.totalorder %s206, %s208
      %p215 = scmp.eq.s32.totalorder %s30, 1
      %p216 = por %p214, %p215
      %p217 = scmp.ne.s32.totalorder %s208, %s209
      %p218 = scmp.eq.s32.totalorder %s30, 0
      %p219 = por %p217, %p218
      %p220 = scmp.ne.s32.totalorder %s208, %s209
      %p221 = scmp.eq.s32.totalorder %s31, 1
      %p222 = por %p220, %p221
      %p224 = scmp.ne.s32.totalorder %s209, %s223
      %p225 = scmp.eq.s32.totalorder %s31, 0
      %p226 = por %p224, %p225
      %s227 = ssub.s32 %s25, %s32
      %p228 = scmp.eq.s32.totalorder %s227, 0
      %s230 = sadd.s32 %s229, 1
      %s231 = scalar_select %p228, %s229, %s230
      %p234 = pneg %p228
      %p235 = scmp.eq.s32.totalorder %s25, 1
      %p236 = por %p234, %p235
      %p237 = scmp.ne.s32.totalorder %s229, %s232
      %p238 = scmp.eq.s32.totalorder %s25, 0
      %p239 = por %p237, %p238
      %p240 = scmp.ne.s32.totalorder %s229, %s232
      %p241 = scmp.eq.s32.totalorder %s30, 1
      %p242 = por %p240, %p241
      %p243 = scmp.ne.s32.totalorder %s232, %s233
      %p244 = scmp.eq.s32.totalorder %s30, 0
      %p245 = por %p243, %p244
      %p246 = scmp.ne.s32.totalorder %s232, %s233
      %p247 = scmp.eq.s32.totalorder %s31, 1
      %p248 = por %p246, %p247
      %p250 = scmp.ne.s32.totalorder %s233, %s249
      %p251 = scmp.eq.s32.totalorder %s31, 0
      %p252 = por %p250, %p251
      %s253 = ssub.s32 %s25, %s32
      %p254 = scmp.eq.s32.totalorder %s253, 0
      %s256 = sadd.s32 %s255, 1
      %s257 = scalar_select %p254, %s255, %s256
      %p260 = pneg %p254
      %p261 = scmp.eq.s32.totalorder %s25, 1
      %p262 = por %p260, %p261
      %p263 = scmp.ne.s32.totalorder %s255, %s258
      %p264 = scmp.eq.s32.totalorder %s25, 0
      %p265 = por %p263, %p264
      %p266 = scmp.ne.s32.totalorder %s255, %s258
      %p267 = scmp.eq.s32.totalorder %s30, 1
      %p268 = por %p266, %p267
      %p269 = scmp.ne.s32.totalorder %s258, %s259
      %p270 = scmp.eq.s32.totalorder %s30, 0
      %p271 = por %p269, %p270
      %p272 = scmp.ne.s32.totalorder %s258, %s259
      %p273 = scmp.eq.s32.totalorder %s31, 1
      %p274 = por %p272, %p273
      %p276 = scmp.ne.s32.totalorder %s259, %s275
      %p277 = scmp.eq.s32.totalorder %s31, 0
      %p278 = por %p276, %p277
      %s279 = ssub.s32 %s25, %s32
      %p280 = scmp.eq.s32.totalorder %s279, 0
      %s282 = sadd.s32 %s281, 1
      %s283 = scalar_select %p280, %s281, %s282
      %p286 = pneg %p280
      %p287 = scmp.eq.s32.totalorder %s25, 1
      %p288 = por %p286, %p287
      %p289 = scmp.ne.s32.totalorder %s281, %s284
      %p290 = scmp.eq.s32.totalorder %s25, 0
      %p291 = por %p289, %p290
      %p292 = scmp.ne.s32.totalorder %s281, %s284
      %p293 = scmp.eq.s32.totalorder %s30, 1
      %p294 = por %p292, %p293
      %p295 = scmp.ne.s32.totalorder %s284, %s285
      %p296 = scmp.eq.s32.totalorder %s30, 0
      %p297 = por %p295, %p296
      %p298 = scmp.ne.s32.totalorder %s284, %s285
      %p299 = scmp.eq.s32.totalorder %s31, 1
      %p300 = por %p298, %p299
      %p302 = scmp.ne.s32.totalorder %s285, %s301
      %p303 = scmp.eq.s32.totalorder %s31, 0
      %p304 = por %p302, %p303
      %s305 = ssub.s32 %s25, %s32
      %p306 = scmp.eq.s32.totalorder %s305, 0
      %s308 = sadd.s32 %s307, 1
      %s309 = scalar_select %p306, %s307, %s308
      %p312 = pneg %p306
      %p313 = scmp.eq.s32.totalorder %s25, 1
      %p314 = por %p312, %p313
      %p315 = scmp.ne.s32.totalorder %s307, %s310
      %p316 = scmp.eq.s32.totalorder %s25, 0
      %p317 = por %p315, %p316
      %p318 = scmp.ne.s32.totalorder %s307, %s310
      %p319 = scmp.eq.s32.totalorder %s30, 1
      %p320 = por %p318, %p319
      %p321 = scmp.ne.s32.totalorder %s310, %s311
      %p322 = scmp.eq.s32.totalorder %s30, 0
      %p323 = por %p321, %p322
      %p324 = scmp.ne.s32.totalorder %s310, %s311
      %p325 = scmp.eq.s32.totalorder %s31, 1
      %p326 = por %p324, %p325
      %p328 = scmp.ne.s32.totalorder %s311, %s327
      %p329 = scmp.eq.s32.totalorder %s31, 0
      %p330 = por %p328, %p329
      %p331 = scmp.le.s32.totalorder 1, %s25
      %p332 = scmp.lt.s32.totalorder %s25, 3
      %p333 = pnand %p331, %p332
      %p334 = pneg %p333
      // Predicated region
      $region9: #{tpu_custom_call.1} parent=5 // pred_check
        _
      $region10: #{tpu_custom_call.1} parent=5 // pred_check_branch
        %336 = sbr.rel (%p333) target = $region12
      $region11: #{tpu_custom_call.1} parent=5 // pred_region
        %s337 = ssub.s32 %s25, 1
        // Predicated region
        $region13: #{tpu_custom_call.1} parent=11 // pred_check
          %p338 = pneg %p72
        $region14: #{tpu_custom_call.1} parent=11 // pred_check_branch
          %340 = sbr.rel (%p338) target = $region16
        $region15: #{tpu_custom_call.1} parent=11 // pred_region
          _
        $region16: #{tpu_custom_call.1} parent=11 // pred_fallthru
          _
        // Predicated region
        $region17: #{tpu_custom_call.1} parent=11 // pred_check
          %p341 = pneg %p93
        $region18: #{tpu_custom_call.1} parent=11 // pred_check_branch
          %343 = sbr.rel (%p341) target = $region20
        $region19: #{tpu_custom_call.1} parent=11 // pred_region
          _
        $region20: #{tpu_custom_call.1} parent=11 // pred_fallthru
          _
        // Predicated region
        $region21: #{tpu_custom_call.1} parent=11 // pred_check
          %p344 = pneg %p114
        $region22: #{tpu_custom_call.1} parent=11 // pred_check_branch
          %346 = sbr.rel (%p344) target = $region24
        $region23: #{tpu_custom_call.1} parent=11 // pred_region
          _
        $region24: #{tpu_custom_call.1} parent=11 // pred_fallthru
          _
        // Predicated region
        $region25: #{tpu_custom_call.1} parent=11 // pred_check
          %p347 = pneg %p135
        $region26: #{tpu_custom_call.1} parent=11 // pred_check_branch
          %349 = sbr.rel (%p347) target = $region28
        $region27: #{tpu_custom_call.1} parent=11 // pred_region
          _
        $region28: #{tpu_custom_call.1} parent=11 // pred_fallthru
          _
        // Predicated region
        $region29: #{tpu_custom_call.1} parent=11 // pred_check
          %p350 = pneg %p156
        $region30: #{tpu_custom_call.1} parent=11 // pred_check_branch
          %352 = sbr.rel (%p350) target = $region32
        $region31: #{tpu_custom_call.1} parent=11 // pred_region
          _
        $region32: #{tpu_custom_call.1} parent=11 // pred_fallthru
          _
        // Predicated region
        $region33: #{tpu_custom_call.1} parent=11 // pred_check
          %p353 = pneg %p177
        $region34: #{tpu_custom_call.1} parent=11 // pred_check_branch
          %355 = sbr.rel (%p353) target = $region36
        $region35: #{tpu_custom_call.1} parent=11 // pred_region
          _
        $region36: #{tpu_custom_call.1} parent=11 // pred_fallthru
          _
        // Predicated region
        $region37: #{tpu_custom_call.1} parent=11 // pred_check
          %p356 = pneg %p198
        $region38: #{tpu_custom_call.1} parent=11 // pred_check_branch
          %358 = sbr.rel (%p356) target = $region40
        $region39: #{tpu_custom_call.1} parent=11 // pred_region
          _
        $region40: #{tpu_custom_call.1} parent=11 // pred_fallthru
          _
        // Predicated region
        $region41: #{tpu_custom_call.1} parent=11 // pred_check
          %p359 = pneg %p219
        $region42: #{tpu_custom_call.1} parent=11 // pred_check_branch
          %361 = sbr.rel (%p359) target = $region44
        $region43: #{tpu_custom_call.1} parent=11 // pred_region
          _
        $region44: #{tpu_custom_call.1} parent=11 // pred_fallthru
          _
      $region12: #{tpu_custom_call.1} parent=5 // pred_fallthru
        _
      %p362 = scmp.lt.s32.totalorder %s25, 2
      // Predicated region
      $region45: #{tpu_custom_call.1} parent=5 // pred_check
        %p363 = pneg %p362
      $region46: #{tpu_custom_call.1} parent=5 // pred_check_branch
        %365 = sbr.rel (%p363) target = $region48
      $region47: #{tpu_custom_call.1} parent=5 // pred_region
        // Predicated region
        $region49: #{tpu_custom_call.1} parent=47 // pred_check
          %p366 = pneg %p45
        $region50: #{tpu_custom_call.1} parent=47 // pred_check_branch
          %368 = sbr.rel (%p366) target = $region52
        $region51: #{tpu_custom_call.1} parent=47 // pred_region
          %p369 = scmp.lt.s32.totalorder %s25, 1
          %s370 = scalar_select %p369, %s25, 1
          %s371 = smul.addr %s370, 2
          %s372 = smul.addr %s371, 8
          %s373 = scalar_lea.vmem %s0, %s372
        $region52: #{tpu_custom_call.1} parent=47 // pred_fallthru
          _
      $region48: #{tpu_custom_call.1} parent=5 // pred_fallthru
        _
      %p374 = scmp.le.s32.totalorder 1, %s25
      %p375 = scmp.lt.s32.totalorder %s25, 3
      %p376 = pnand %p374, %p375
      %p377 = pneg %p376
      // Predicated region
      $region53: #{tpu_custom_call.1} parent=5 // pred_check
        _
      $region54: #{tpu_custom_call.1} parent=5 // pred_check_branch
        %379 = sbr.rel (%p376) target = $region56
      $region55: #{tpu_custom_call.1} parent=5 // pred_region
        %s380 = ssub.s32 %s25, 1
        %p381 = scmp.lt.s32.totalorder %s30, 1
        %s382 = scalar_select %p381, %s30, 1
        %s383 = smul.addr %s382, 2
        %s384 = smul.addr %s383, 8
        %s385 = scalar_lea.vmem %s0, %s384
        %p386 = pneg %p51
        %p387 = pneg %p48
        %p388 = pneg %p72
        %p389 = pneg %p69
        %p390 = pneg %p93
        %p391 = pneg %p90
        %p392 = pneg %p114
        %p393 = pneg %p111
        %p394 = pneg %p135
        %p395 = pneg %p132
        %p396 = pneg %p156
        %p397 = pneg %p153
        %p398 = pneg %p177
        %p399 = pneg %p174
        %p400 = pneg %p198
        %p401 = pneg %p195
        %p402 = pneg %p219
        %p403 = pneg %p216
        %p404 = pneg %p245
        %p405 = pneg %p242
        %s406 = sand.u32 %s232, 1
        %s407 = scalar_lea.sflag [#allocation3], %s406
        %s408 = sand.u32 %s232, 1
        %s409 = smul.addr %s408, 16
        %s410 = scalar_lea.vmem [#allocation2], %s409
        %p411 = pneg %p271
        %p412 = pneg %p268
        %p413 = scmp.lt.s32.totalorder %s30, 1
        %s414 = scalar_select %p413, %s30, 1
        %s415 = smul.addr %s414, 2
        %s416 = smul.addr %s415, 8
        %s417 = scalar_lea.vmem %s10, %s416
        %p418 = pneg %p297
        %p419 = pneg %p294
        %s420 = sand.u32 %s284, 1
        %s421 = scalar_lea.sflag [#allocation5], %s420
        %s422 = sand.u32 %s284, 1
        %s423 = smul.addr %s422, 2
        %s424 = scalar_lea.vmem [#allocation4], %s423
        %p425 = pneg %p323
        %p426 = pneg %p320
        %p427 = scmp.lt.s32.totalorder %s30, 1
        %s428 = scalar_select %p427, %s30, 1
        %s429 = scalar_lea.vmem %s12, %s428
        %p430 = scmp.lt.s32.totalorder %s30, 1
        %s431 = scalar_select %p430, %s30, 1
        %s432 = smul.addr %s431, 2
        %s433 = smul.addr %s432, 8
        %s434 = scalar_lea.vmem %s0, %s433
        %p435 = scmp.lt.s32.totalorder %s30, 1
        %s436 = scalar_select %p435, %s30, 1
        %s437 = smul.addr %s436, 2
        %s438 = smul.addr %s437, 8
        %s439 = scalar_lea.vmem %s10, %s438
        %p440 = scmp.lt.s32.totalorder %s30, 1
        %s441 = scalar_select %p440, %s30, 1
        %s442 = scalar_lea.vmem %s12, %s441
        %v444 = vld [vmem:[%s434] sm:$0xff]
        %v445 = vld [vmem:[%s434 + $0x8] sm:$0xff]
        %v446 = vpack.c.bf16 %v445, %v444
        %v447 = vld [vmem:[%s1] sm:$0xf]
        %v448 = vld [vmem:[%s1 + $0x4] sm:$0xf]
        %v449 = vld [vmem:[%s1 + $0x8] sm:$0xf]
        %v450 = vld [vmem:[%s1 + $0xc] sm:$0xf]
        %v455 = vunpack.c.l.b16 %v447
        %v456 = vunpack.c.l.b16 %v448
        %v457 = vunpack.c.l.b16 %v449
        %v458 = vunpack.c.l.b16 %v450
        %v459 = vpack.c.b16 %v456, %v455
        %v460 = vpack.c.b16 %v458, %v457
        %vm463 = vcmask 261120
        %v465 = vsel %vm463, %v446, 0
        %467 = vmatprep.subr.bf16.mxu0 0
        %468 = vmatpush1.bf16.msra.mxu0 %v459
        %469 = vmatprep.subr.bf16.mxu0 0
        %470 = vmatpush1.bf16.msra.mxu0 %v460
        %471 = vmatprep.subr.bf16.mxu0 0
        %472 = vmatpush1.bf16.msra.mxu0 0
        %473 = vmatprep.subr.bf16.mxu0 0
        %474 = vmatpush1.bf16.msra.mxu0 0
        %475 = vmatprep.subr.bf16.mxu0 0
        %476 = vmatpush1.bf16.msra.mxu0 0
        %477 = vmatprep.subr.bf16.mxu0 0
        %478 = vmatpush1.bf16.msra.mxu0 0
        %479 = vmatprep.subr.bf16.mxu0 0
        %480 = vmatpush1.bf16.msra.mxu0 0
        %481 = vmatprep.subr.bf16.mxu0 0
        %482 = vmatpush1.bf16.msra.mxu0 0
        %483 = vmatprep.subr.bf16.mxu0 0
        %484 = vmatpush1.bf16.msra.mxu0 0
        %485 = vmatprep.subr.bf16.mxu0 0
        %486 = vmatpush1.bf16.msra.mxu0 0
        %487 = vmatprep.subr.bf16.mxu0 0
        %488 = vmatpush1.bf16.msra.mxu0 0
        %489 = vmatprep.subr.bf16.mxu0 0
        %490 = vmatpush1.bf16.msra.mxu0 0
        %491 = vmatprep.subr.bf16.mxu0 0
        %492 = vmatpush1.bf16.msra.mxu0 0
        %493 = vmatprep.subr.bf16.mxu0 0
        %494 = vmatpush1.bf16.msra.mxu0 0
        %495 = vmatprep.subr.bf16.mxu0 0
        %496 = vmatpush1.bf16.msra.mxu0 0
        %497 = vmatprep.subr.bf16.mxu0 0
        %498 = vmatpush1.bf16.msra.mxu0 0
        %499 = vmatprep.mubr.bf16.mxu0 0
        %500 = vmatmul.mubr.bf16.gmra.mrb[0].mxu0 %v465
        %v501 = vpop.f32.mrb[0].mxu0
        %v502 = vadd.f32 0.0, %v501
        %v503 = vpop.f32.mrb[0].mxu0
        %v504 = vpop.f32.mrb[0].mxu0
        %v505 = vadd.f32 0.0, %v504
        %v506 = vpop.f32.mrb[0].mxu0
        %507 = vdwg.mxu0
        %v508 = vsel %vm463, %v502, 0.0
        %v509 = vsel %vm463, %v505, 0.0
        %v510 = vadd.f32 %v508, %v509
        %v511 = vrot.slane %v510, 4
        %v512 = vadd.f32 %v510, %v511
        %v513 = vrot.slane %v512, 2
        %v514 = vadd.f32 %v512, %v513
        %v515 = vrot.slane %v514, 1
        %v516 = vadd.f32 %v514, %v515
        %v517 = vld [vmem:[%s4] sm:$0xff]
        %v518 = vld [vmem:[%s4 + $0x8] sm:$0xff]
        %v519 = vld [vmem:[%s4 + $0x10] sm:$0xff]
        %v520 = vld [vmem:[%s4 + $0x18] sm:$0xff]
        %v522 = vsel %vm463, %v516, 0
        %524 = vmatprep.subr.mxu0 0.0
        %525 = vmatpush1.msra.mxu0 %v517
        %526 = vmatprep.subr.mxu0 0.0
        %527 = vmatpush1.msra.mxu0 %v518
        %528 = vmatprep.subr.mxu0 0.0
        %529 = vmatpush1.msra.mxu0 %v519
        %530 = vmatprep.subr.mxu0 0.0
        %531 = vmatpush1.msra.mxu0 %v520
        %532 = vmatprep.subr.mxu0 0.0
        %533 = vmatpush1.msra.mxu0 0.0
        %534 = vmatprep.subr.mxu0 0.0
        %535 = vmatpush1.msra.mxu0 0.0
        %536 = vmatprep.subr.mxu0 0.0
        %537 = vmatpush1.msra.mxu0 0.0
        %538 = vmatprep.subr.mxu0 0.0
        %539 = vmatpush1.msra.mxu0 0.0
        %540 = vmatprep.subr.mxu0 0.0
        %541 = vmatpush1.msra.mxu0 0.0
        %542 = vmatprep.subr.mxu0 0.0
        %543 = vmatpush1.msra.mxu0 0.0
        %544 = vmatprep.subr.mxu0 0.0
        %545 = vmatpush1.msra.mxu0 0.0
        %546 = vmatprep.subr.mxu0 0.0
        %547 = vmatpush1.msra.mxu0 0.0
        %548 = vmatprep.subr.mxu0 0.0
        %549 = vmatpush1.msra.mxu0 0.0
        %550 = vmatprep.subr.mxu0 0.0
        %551 = vmatpush1.msra.mxu0 0.0
        %552 = vmatprep.subr.mxu0 0.0
        %553 = vmatpush1.msra.mxu0 0.0
        %554 = vmatprep.subr.mxu0 0.0
        %555 = vmatpush1.msra.mxu0 0.0
        %556 = vmatprep.subr.mxu0 0.0
        %557 = vmatpush1.msra.mxu0 0.0
        %558 = vmatprep.subr.mxu0 0.0
        %559 = vmatpush1.msra.mxu0 0.0
        %560 = vmatprep.subr.mxu0 0.0
        %561 = vmatpush1.msra.mxu0 0.0
        %562 = vmatprep.subr.mxu0 0.0
        %563 = vmatpush1.msra.mxu0 0.0
        %564 = vmatprep.subr.mxu0 0.0
        %565 = vmatpush1.msra.mxu0 0.0
        %566 = vmatprep.subr.mxu0 0.0
        %567 = vmatpush1.msra.mxu0 0.0
        %568 = vmatprep.subr.mxu0 0.0
        %569 = vmatpush1.msra.mxu0 0.0
        %570 = vmatprep.subr.mxu0 0.0
        %571 = vmatpush1.msra.mxu0 0.0
        %572 = vmatprep.subr.mxu0 0.0
        %573 = vmatpush1.msra.mxu0 0.0
        %574 = vmatprep.subr.mxu0 0.0
        %575 = vmatpush1.msra.mxu0 0.0
        %576 = vmatprep.subr.mxu0 0.0
        %577 = vmatpush1.msra.mxu0 0.0
        %578 = vmatprep.subr.mxu0 0.0
        %579 = vmatpush1.msra.mxu0 0.0
        %580 = vmatprep.subr.mxu0 0.0
        %581 = vmatpush1.msra.mxu0 0.0
        %582 = vmatprep.subr.mxu0 0.0
        %583 = vmatpush1.msra.mxu0 0.0
        %584 = vmatprep.subr.mxu0 0.0
        %585 = vmatpush1.msra.mxu0 0.0
        %586 = vmatprep.subr.mxu0 0.0
        %587 = vmatpush1.msra.mxu0 0.0
        %588 = vmatprep.mubr.f32.mxu0 0.0
        %589 = vmatmul.mubr.f32.gmra.mrb[0].mxu0 %v522
        %v590 = vpop.f32.mrb[0].mxu0
        %v591 = vadd.f32 0.0, %v590
        %v592 = vpop.f32.mrb[0].mxu0
        %593 = vdwg.mxu0
        %v594 = vmul.f32 %v591, 0.00390625
        %v595 = vld [vmem:[%s5] sm:$0x3]
        %vm596 = vcmask 15360
        %v598 = vsel %vm596, %v594, 0
        %vm600 = vcmask 1041408
        %v602 = vsel %vm600, %v595, 0
        %604 = vmatprep.subr.mxu0 0.0
        %605 = vmatpush1.msra.mxu0 %v602
        %606 = vmatprep.subr.mxu0 0.0
        %607 = vmatpush1.msra.mxu0 0.0
        %608 = vmatprep.subr.mxu0 0.0
        %609 = vmatpush1.msra.mxu0 0.0
        %610 = vmatprep.subr.mxu0 0.0
        %611 = vmatpush1.msra.mxu0 0.0
        %612 = vmatprep.subr.mxu0 0.0
        %613 = vmatpush1.msra.mxu0 0.0
        %614 = vmatprep.subr.mxu0 0.0
        %615 = vmatpush1.msra.mxu0 0.0
        %616 = vmatprep.subr.mxu0 0.0
        %617 = vmatpush1.msra.mxu0 0.0
        %618 = vmatprep.subr.mxu0 0.0
        %619 = vmatpush1.msra.mxu0 0.0
        %620 = vmatprep.subr.mxu0 0.0
        %621 = vmatpush1.msra.mxu0 0.0
        %622 = vmatprep.subr.mxu0 0.0
        %623 = vmatpush1.msra.mxu0 0.0
        %624 = vmatprep.subr.mxu0 0.0
        %625 = vmatpush1.msra.mxu0 0.0
        %626 = vmatprep.subr.mxu0 0.0
        %627 = vmatpush1.msra.mxu0 0.0
        %628 = vmatprep.subr.mxu0 0.0
        %629 = vmatpush1.msra.mxu0 0.0
        %630 = vmatprep.subr.mxu0 0.0
        %631 = vmatpush1.msra.mxu0 0.0
        %632 = vmatprep.subr.mxu0 0.0
        %633 = vmatpush1.msra.mxu0 0.0
        %634 = vmatprep.subr.mxu0 0.0
        %635 = vmatpush1.msra.mxu0 0.0
        %636 = vmatprep.subr.mxu0 0.0
        %637 = vmatpush1.msra.mxu0 0.0
        %638 = vmatprep.subr.mxu0 0.0
        %639 = vmatpush1.msra.mxu0 0.0
        %640 = vmatprep.subr.mxu0 0.0
        %641 = vmatpush1.msra.mxu0 0.0
        %642 = vmatprep.subr.mxu0 0.0
        %643 = vmatpush1.msra.mxu0 0.0
        %644 = vmatprep.subr.mxu0 0.0
        %645 = vmatpush1.msra.mxu0 0.0
        %646 = vmatprep.subr.mxu0 0.0
        %647 = vmatpush1.msra.mxu0 0.0
        %648 = vmatprep.subr.mxu0 0.0
        %649 = vmatpush1.msra.mxu0 0.0
        %650 = vmatprep.subr.mxu0 0.0
        %651 = vmatpush1.msra.mxu0 0.0
        %652 = vmatprep.subr.mxu0 0.0
        %653 = vmatpush1.msra.mxu0 0.0
        %654 = vmatprep.subr.mxu0 0.0
        %655 = vmatpush1.msra.mxu0 0.0
        %656 = vmatprep.subr.mxu0 0.0
        %657 = vmatpush1.msra.mxu0 0.0
        %658 = vmatprep.subr.mxu0 0.0
        %659 = vmatpush1.msra.mxu0 0.0
        %660 = vmatprep.subr.mxu0 0.0
        %661 = vmatpush1.msra.mxu0 0.0
        %662 = vmatprep.subr.mxu0 0.0
        %663 = vmatpush1.msra.mxu0 0.0
        %664 = vmatprep.subr.mxu0 0.0
        %665 = vmatpush1.msra.mxu0 0.0
        %666 = vmatprep.subr.mxu0 0.0
        %667 = vmatpush1.msra.mxu0 0.0
        %668 = vmatprep.mubr.f32.mxu0 0.0
        %669 = vmatmul.mubr.f32.gmra.mrb[0].mxu0 %v598
        %v670 = vpop.f32.mrb[0].mxu0
        %v671 = vadd.f32 0.0, %v670
        %v672 = vpop.f32.mrb[0].mxu0
        %673 = vdwg.mxu0
        %v674 = vlaneseq
        %v675 = vshrl.u32 %v674, 7
        %v676 = vsub.s32 0, %v675
        %v677 = vrot.slane %v671, %v676
        %v678 = vsub.f32 %v502, %v677
        %v679 = vsub.f32 %v505, %v677
        %v680 = vmul.f32 %v678, %v678
        %v681 = vmul.f32 %v679, %v679
        %v682 = vsel %vm463, %v680, 0.0
        %v683 = vsel %vm463, %v681, 0.0
        %v684 = vadd.f32 %v682, %v683
        %v685 = vrot.slane %v684, 4
        %v686 = vadd.f32 %v684, %v685
        %v687 = vrot.slane %v686, 2
        %v688 = vadd.f32 %v686, %v687
        %v689 = vrot.slane %v688, 1
        %v690 = vadd.f32 %v688, %v689
        %v692 = vsel %vm463, %v690, 0
        %694 = vmatprep.subr.mxu0 0.0
        %695 = vmatpush1.msra.mxu0 %v517
        %696 = vmatprep.subr.mxu0 0.0
        %697 = vmatpush1.msra.mxu0 %v518
        %698 = vmatprep.subr.mxu0 0.0
        %699 = vmatpush1.msra.mxu0 %v519
        %700 = vmatprep.subr.mxu0 0.0
        %701 = vmatpush1.msra.mxu0 %v520
        %702 = vmatprep.subr.mxu0 0.0
        %703 = vmatpush1.msra.mxu0 0.0
        %704 = vmatprep.subr.mxu0 0.0
        %705 = vmatpush1.msra.mxu0 0.0
        %706 = vmatprep.subr.mxu0 0.0
        %707 = vmatpush1.msra.mxu0 0.0
        %708 = vmatprep.subr.mxu0 0.0
        %709 = vmatpush1.msra.mxu0 0.0
        %710 = vmatprep.subr.mxu0 0.0
        %711 = vmatpush1.msra.mxu0 0.0
        %712 = vmatprep.subr.mxu0 0.0
        %713 = vmatpush1.msra.mxu0 0.0
        %714 = vmatprep.subr.mxu0 0.0
        %715 = vmatpush1.msra.mxu0 0.0
        %716 = vmatprep.subr.mxu0 0.0
        %717 = vmatpush1.msra.mxu0 0.0
        %718 = vmatprep.subr.mxu0 0.0
        %719 = vmatpush1.msra.mxu0 0.0
        %720 = vmatprep.subr.mxu0 0.0
        %721 = vmatpush1.msra.mxu0 0.0
        %722 = vmatprep.subr.mxu0 0.0
        %723 = vmatpush1.msra.mxu0 0.0
        %724 = vmatprep.subr.mxu0 0.0
        %725 = vmatpush1.msra.mxu0 0.0
        %726 = vmatprep.subr.mxu0 0.0
        %727 = vmatpush1.msra.mxu0 0.0
        %728 = vmatprep.subr.mxu0 0.0
        %729 = vmatpush1.msra.mxu0 0.0
        %730 = vmatprep.subr.mxu0 0.0
        %731 = vmatpush1.msra.mxu0 0.0
        %732 = vmatprep.subr.mxu0 0.0
        %733 = vmatpush1.msra.mxu0 0.0
        %734 = vmatprep.subr.mxu0 0.0
        %735 = vmatpush1.msra.mxu0 0.0
        %736 = vmatprep.subr.mxu0 0.0
        %737 = vmatpush1.msra.mxu0 0.0
        %738 = vmatprep.subr.mxu0 0.0
        %739 = vmatpush1.msra.mxu0 0.0
        %740 = vmatprep.subr.mxu0 0.0
        %741 = vmatpush1.msra.mxu0 0.0
        %742 = vmatprep.subr.mxu0 0.0
        %743 = vmatpush1.msra.mxu0 0.0
        %744 = vmatprep.subr.mxu0 0.0
        %745 = vmatpush1.msra.mxu0 0.0
        %746 = vmatprep.subr.mxu0 0.0
        %747 = vmatpush1.msra.mxu0 0.0
        %748 = vmatprep.subr.mxu0 0.0
        %749 = vmatpush1.msra.mxu0 0.0
        %750 = vmatprep.subr.mxu0 0.0
        %751 = vmatpush1.msra.mxu0 0.0
        %752 = vmatprep.subr.mxu0 0.0
        %753 = vmatpush1.msra.mxu0 0.0
        %754 = vmatprep.subr.mxu0 0.0
        %755 = vmatpush1.msra.mxu0 0.0
        %756 = vmatprep.subr.mxu0 0.0
        %757 = vmatpush1.msra.mxu0 0.0
        %758 = vmatprep.mubr.f32.mxu0 0.0
        %759 = vmatmul.mubr.f32.gmra.mrb[0].mxu0 %v692
        %v760 = vpop.f32.mrb[0].mxu0
        %v761 = vadd.f32 0.0, %v760
        %v762 = vpop.f32.mrb[0].mxu0
        %763 = vdwg.mxu0
        %v764 = vmul.f32 %v761, 0.00390625
        %v765 = vadd.f32 %v764, 1e-05
        %v766 = vrsqrt.pop %v765
        %v768 = vsel %vm596, %v766, 0
        %770 = vmatprep.subr.mxu0 0.0
        %771 = vmatpush1.msra.mxu0 %v602
        %772 = vmatprep.subr.mxu0 0.0
        %773 = vmatpush1.msra.mxu0 0.0
        %774 = vmatprep.subr.mxu0 0.0
        %775 = vmatpush1.msra.mxu0 0.0
        %776 = vmatprep.subr.mxu0 0.0
        %777 = vmatpush1.msra.mxu0 0.0
        %778 = vmatprep.subr.mxu0 0.0
        %779 = vmatpush1.msra.mxu0 0.0
        %780 = vmatprep.subr.mxu0 0.0
        %781 = vmatpush1.msra.mxu0 0.0
        %782 = vmatprep.subr.mxu0 0.0
        %783 = vmatpush1.msra.mxu0 0.0
        %784 = vmatprep.subr.mxu0 0.0
        %785 = vmatpush1.msra.mxu0 0.0
        %786 = vmatprep.subr.mxu0 0.0
        %787 = vmatpush1.msra.mxu0 0.0
        %788 = vmatprep.subr.mxu0 0.0
        %789 = vmatpush1.msra.mxu0 0.0
        %790 = vmatprep.subr.mxu0 0.0
        %791 = vmatpush1.msra.mxu0 0.0
        %792 = vmatprep.subr.mxu0 0.0
        %793 = vmatpush1.msra.mxu0 0.0
        %794 = vmatprep.subr.mxu0 0.0
        %795 = vmatpush1.msra.mxu0 0.0
        %796 = vmatprep.subr.mxu0 0.0
        %797 = vmatpush1.msra.mxu0 0.0
        %798 = vmatprep.subr.mxu0 0.0
        %799 = vmatpush1.msra.mxu0 0.0
        %800 = vmatprep.subr.mxu0 0.0
        %801 = vmatpush1.msra.mxu0 0.0
        %802 = vmatprep.subr.mxu0 0.0
        %803 = vmatpush1.msra.mxu0 0.0
        %804 = vmatprep.subr.mxu0 0.0
        %805 = vmatpush1.msra.mxu0 0.0
        %806 = vmatprep.subr.mxu0 0.0
        %807 = vmatpush1.msra.mxu0 0.0
        %808 = vmatprep.subr.mxu0 0.0
        %809 = vmatpush1.msra.mxu0 0.0
        %810 = vmatprep.subr.mxu0 0.0
        %811 = vmatpush1.msra.mxu0 0.0
        %812 = vmatprep.subr.mxu0 0.0
        %813 = vmatpush1.msra.mxu0 0.0
        %814 = vmatprep.subr.mxu0 0.0
        %815 = vmatpush1.msra.mxu0 0.0
        %816 = vmatprep.subr.mxu0 0.0
        %817 = vmatpush1.msra.mxu0 0.0
        %818 = vmatprep.subr.mxu0 0.0
        %819 = vmatpush1.msra.mxu0 0.0
        %820 = vmatprep.subr.mxu0 0.0
        %821 = vmatpush1.msra.mxu0 0.0
        %822 = vmatprep.subr.mxu0 0.0
        %823 = vmatpush1.msra.mxu0 0.0
        %824 = vmatprep.subr.mxu0 0.0
        %825 = vmatpush1.msra.mxu0 0.0
        %826 = vmatprep.subr.mxu0 0.0
        %827 = vmatpush1.msra.mxu0 0.0
        %828 = vmatprep.subr.mxu0 0.0
        %829 = vmatpush1.msra.mxu0 0.0
        %830 = vmatprep.subr.mxu0 0.0
        %831 = vmatpush1.msra.mxu0 0.0
        %832 = vmatprep.subr.mxu0 0.0
        %833 = vmatpush1.msra.mxu0 0.0
        %834 = vmatprep.mubr.f32.mxu0 0.0
        %835 = vmatmul.mubr.f32.gmra.mrb[0].mxu0 %v768
        %v836 = vpop.f32.mrb[0].mxu0
        %v837 = vadd.f32 0.0, %v836
        %v838 = vpop.f32.mrb[0].mxu0
        %839 = vdwg.mxu0
        %v840 = vlaneseq
        %v841 = vshrl.u32 %v840, 7
        %v842 = vsub.s32 0, %v841
        %v843 = vrot.slane %v837, %v842
        %v844 = vmul.f32 %v678, %v843
        %v845 = vmul.f32 %v679, %v843
        %v846 = vld [vmem:[%s2] sm:$0x1]
        %v848 = vlaneseq
        %v849 = vshrl.u32 %v848, 7
        %v850 = vsub.s32 0, %v849
        %v851 = vrot.slane %v846, %v850
        %v853 = vmul.f32 %v844, %v851
        %v854 = vmul.f32 %v845, %v851
        %v855 = vld [vmem:[%s3] sm:$0x1]
        %v857 = vlaneseq
        %v858 = vshrl.u32 %v857, 7
        %v859 = vsub.s32 0, %v858
        %v860 = vrot.slane %v855, %v859
        %v862 = vadd.f32 %v853, %v860
        %v863 = vadd.f32 %v854, %v860
        %v864 = vpack.c.bf16 %v863, %v862
        %v865 = vld [vmem:[%s6] sm:$0xff]
        %v866 = vld [vmem:[%s6 + $0x8] sm:$0xff]
        %v867 = vld [vmem:[%s6 + $0x10] sm:$0xff]
        %v868 = vld [vmem:[%s6 + $0x18] sm:$0xff]
        %v873 = vunpack.c.l.b16 %v865
        %v874 = vunpack.c.h.b16 %v865
        %v875 = vunpack.c.l.b16 %v866
        %v876 = vunpack.c.h.b16 %v866
        %v877 = vunpack.c.l.b16 %v867
        %v878 = vunpack.c.h.b16 %v867
        %v879 = vunpack.c.l.b16 %v868
        %v880 = vunpack.c.h.b16 %v868
        %v881 = vpack.c.b16 %v875, %v873
        %v882 = vpack.c.b16 %v876, %v874
        %v883 = vpack.c.b16 %v879, %v877
        %v884 = vpack.c.b16 %v880, %v878
        %v890 = vsel %vm463, %v864, 0
        %892 = vmatprep.subr.bf16.mxu0 %v882
        %893 = vmatpush1.bf16.msra.mxu0 %v881
        %894 = vmatprep.subr.bf16.mxu0 %v884
        %895 = vmatpush1.bf16.msra.mxu0 %v883
        %896 = vmatprep.subr.bf16.mxu0 0
        %897 = vmatpush1.bf16.msra.mxu0 0
        %898 = vmatprep.subr.bf16.mxu0 0
        %899 = vmatpush1.bf16.msra.mxu0 0
        %900 = vmatprep.subr.bf16.mxu0 0
        %901 = vmatpush1.bf16.msra.mxu0 0
        %902 = vmatprep.subr.bf16.mxu0 0
        %903 = vmatpush1.bf16.msra.mxu0 0
        %904 = vmatprep.subr.bf16.mxu0 0
        %905 = vmatpush1.bf16.msra.mxu0 0
        %906 = vmatprep.subr.bf16.mxu0 0
        %907 = vmatpush1.bf16.msra.mxu0 0
        %908 = vmatprep.subr.bf16.mxu0 0
        %909 = vmatpush1.bf16.msra.mxu0 0
        %910 = vmatprep.subr.bf16.mxu0 0
        %911 = vmatpush1.bf16.msra.mxu0 0
        %912 = vmatprep.subr.bf16.mxu0 0
        %913 = vmatpush1.bf16.msra.mxu0 0
        %914 = vmatprep.subr.bf16.mxu0 0
        %915 = vmatpush1.bf16.msra.mxu0 0
        %916 = vmatprep.subr.bf16.mxu0 0
        %917 = vmatpush1.bf16.msra.mxu0 0
        %918 = vmatprep.subr.bf16.mxu0 0
        %919 = vmatpush1.bf16.msra.mxu0 0
        %920 = vmatprep.subr.bf16.mxu0 0
        %921 = vmatpush1.bf16.msra.mxu0 0
        %922 = vmatprep.subr.bf16.mxu0 0
        %923 = vmatpush1.bf16.msra.mxu0 0
        %924 = vmatprep.mubr.bf16.mxu0 0
        %925 = vmatmul.mubr.bf16.gmra.mrb[0].mxu0 %v890
        %v926 = vpop.f32.mrb[0].mxu0
        %v927 = vadd.f32 0.0, %v926
        %v928 = vpop.f32.mrb[0].mxu0
        %v929 = vadd.f32 0.0, %v928
        %v930 = vpop.f32.mrb[0].mxu0
        %v931 = vadd.f32 0.0, %v930
        %v932 = vpop.f32.mrb[0].mxu0
        %v933 = vadd.f32 0.0, %v932
        %934 = vdwg.mxu0
        %v935 = vld [vmem:[%s8] sm:$0x3]
        %v936 = vmul.f32 %v927, 2.0
        %v937 = vmul.f32 %v929, 2.0
        %v938 = vmul.f32 %v931, 2.0
        %v939 = vmul.f32 %v933, 2.0
        %v941 = vlaneseq
        %v942 = vshrl.u32 %v941, 7
        %v943 = vsub.s32 0, %v942
        %v944 = vrot.slane %v935, %v943
        %v945 = vlaneseq
        %v946 = vshrl.u32 %v945, 7
        %v947 = vsub.s32 1, %v946
        %v948 = vrot.slane %v935, %v947
        %v951 = vsub.f32 %v944, %v936
        %v952 = vsub.f32 %v948, %v937
        %v953 = vsub.f32 %v944, %v938
        %v954 = vsub.f32 %v948, %v939
        %955 = vmin.xlane.f32.xlu0 %v951
        %v956 = vpop.xlane.xlu0 %955
        %957 = vmin.xlane.f32.xlu0 %v953
        %v958 = vpop.xlane.xlu0 %957
        %v959 = vlaneseq
        %v960 = vand.u32 %v959, 127
        %vm961 = vcmp.le.f32.partialorder %v951, %v956
        %vm962 = vcmp.le.f32.partialorder %v953, %v958
        %v963 = vsel %vm961, %v960, 128
        %v964 = vsel %vm962, %v960, 128
        %v965 = vand.u32 %v963, 65535
        %v966 = vshra.s32 %v963, 16
        %v967 = vcvt.s32.f32 %v965
        %v968 = vcvt.s32.f32 %v966
        %969 = vmin.xlane.f32.xlu0 %v968
        %v970 = vpop.xlane.xlu0 %969
        %vm971 = vcmp.eq.f32.partialorder %v968, %v970
        %v972 = vsel %vm971, %v967, inf
        %973 = vmin.xlane.f32.xlu0 %v972
        %v974 = vpop.xlane.xlu0 %973
        %v975 = vcvt.f32.s32 %v974
        %v976 = vcvt.f32.s32 %v970
        %v977 = vshll.u32 %v976, 16
        %v978 = vadd.s32 %v977, %v975
        %v979 = vand.u32 %v964, 65535
        %v980 = vshra.s32 %v964, 16
        %v981 = vcvt.s32.f32 %v979
        %v982 = vcvt.s32.f32 %v980
        %983 = vmin.xlane.f32.xlu0 %v982
        %v984 = vpop.xlane.xlu0 %983
        %vm985 = vcmp.eq.f32.partialorder %v982, %v984
        %v986 = vsel %vm985, %v981, inf
        %987 = vmin.xlane.f32.xlu0 %v986
        %v988 = vpop.xlane.xlu0 %987
        %v989 = vcvt.f32.s32 %v988
        %v990 = vcvt.f32.s32 %v984
        %v991 = vshll.u32 %v990, 16
        %v992 = vadd.s32 %v991, %v989
        %vm993 = vcmp.eq.s32.totalorder %v960, %v978
        %vm994 = vcmp.eq.s32.totalorder %v960, %v992
        %v995 = vsel %vm993, 1, 0
        %v996 = vsel %vm994, 1, 0
        %v997 = vcvt.s32.f32 %v995
        %v998 = vcvt.s32.f32 %v996
        %v999 = vpack.c.bf16 %v998, %v997
        %v1000 = vadd.f32 %v997, %v998
        %v1001 = vrot.slane %v1000, 4
        %v1002 = vadd.f32 %v1000, %v1001
        %v1003 = vrot.slane %v1002, 2
        %v1004 = vadd.f32 %v1002, %v1003
        %v1005 = vrot.slane %v1004, 1
        %v1006 = vadd.f32 %v1004, %v1005
        %1007 = vmin.xlane.f32.xlu0 %v952
        %v1008 = vpop.xlane.xlu0 %1007
        %1009 = vmin.xlane.f32.xlu0 %v954
        %v1010 = vpop.xlane.xlu0 %1009
        %vm1011 = vcmp.le.f32.partialorder %v952, %v1008
        %vm1012 = vcmp.le.f32.partialorder %v954, %v1010
        %v1013 = vsel %vm1011, %v960, 128
        %v1014 = vsel %vm1012, %v960, 128
        %v1015 = vand.u32 %v1013, 65535
        %v1016 = vshra.s32 %v1013, 16
        %v1017 = vcvt.s32.f32 %v1015
        %v1018 = vcvt.s32.f32 %v1016
        %1019 = vmin.xlane.f32.xlu0 %v1018
        %v1020 = vpop.xlane.xlu0 %1019
        %vm1021 = vcmp.eq.f32.partialorder %v1018, %v1020
        %v1022 = vsel %vm1021, %v1017, inf
        %1023 = vmin.xlane.f32.xlu0 %v1022
        %v1024 = vpop.xlane.xlu0 %1023
        %v1025 = vcvt.f32.s32 %v1024
        %v1026 = vcvt.f32.s32 %v1020
        %v1027 = vshll.u32 %v1026, 16
        %v1028 = vadd.s32 %v1027, %v1025
        %v1029 = vand.u32 %v1014, 65535
        %v1030 = vshra.s32 %v1014, 16
        %v1031 = vcvt.s32.f32 %v1029
        %v1032 = vcvt.s32.f32 %v1030
        %1033 = vmin.xlane.f32.xlu0 %v1032
        %v1034 = vpop.xlane.xlu0 %1033
        %vm1035 = vcmp.eq.f32.partialorder %v1032, %v1034
        %v1036 = vsel %vm1035, %v1031, inf
        %1037 = vmin.xlane.f32.xlu0 %v1036
        %v1038 = vpop.xlane.xlu0 %1037
        %v1039 = vcvt.f32.s32 %v1038
        %v1040 = vcvt.f32.s32 %v1034
        %v1041 = vshll.u32 %v1040, 16
        %v1042 = vadd.s32 %v1041, %v1039
        %vm1043 = vcmp.eq.s32.totalorder %v960, %v1028
        %vm1044 = vcmp.eq.s32.totalorder %v960, %v1042
        %v1045 = vsel %vm1043, 1, 0
        %v1046 = vsel %vm1044, 1, 0
        %v1047 = vcvt.s32.f32 %v1045
        %v1048 = vcvt.s32.f32 %v1046
        %v1049 = vpack.c.bf16 %v1048, %v1047
        %v1050 = vadd.f32 %v1047, %v1048
        %v1051 = vrot.slane %v1050, 4
        %v1052 = vadd.f32 %v1050, %v1051
        %v1053 = vrot.slane %v1052, 2
        %v1054 = vadd.f32 %v1052, %v1053
        %v1055 = vrot.slane %v1054, 1
        %v1056 = vadd.f32 %v1054, %v1055
        %v1057 = vld [vmem:[%s7] sm:$0xf]
        %v1058 = vld [vmem:[%s7 + $0x4] sm:$0xf]
        %v1059 = vld [vmem:[%s7 + $0x8] sm:$0xf]
        %v1060 = vld [vmem:[%s7 + $0xc] sm:$0xf]
        %v1061 = vld [vmem:[%s7 + $0x10] sm:$0xf]
        %v1062 = vld [vmem:[%s7 + $0x14] sm:$0xf]
        %v1063 = vld [vmem:[%s7 + $0x18] sm:$0xf]
        %v1064 = vld [vmem:[%s7 + $0x1c] sm:$0xf]
        %v1065 = vld [vmem:[%s7 + $0x20] sm:$0xf]
        %v1066 = vld [vmem:[%s7 + $0x24] sm:$0xf]
        %v1067 = vld [vmem:[%s7 + $0x28] sm:$0xf]
        %v1068 = vld [vmem:[%s7 + $0x2c] sm:$0xf]
        %v1069 = vld [vmem:[%s7 + $0x30] sm:$0xf]
        %v1070 = vld [vmem:[%s7 + $0x34] sm:$0xf]
        %v1071 = vld [vmem:[%s7 + $0x38] sm:$0xf]
        %v1072 = vld [vmem:[%s7 + $0x3c] sm:$0xf]
        %v1073 = vld [vmem:[%s7 + $0x40] sm:$0xf]
        %v1074 = vld [vmem:[%s7 + $0x44] sm:$0xf]
        %v1075 = vld [vmem:[%s7 + $0x48] sm:$0xf]
        %v1076 = vld [vmem:[%s7 + $0x4c] sm:$0xf]
        %v1077 = vld [vmem:[%s7 + $0x50] sm:$0xf]
        %v1078 = vld [vmem:[%s7 + $0x54] sm:$0xf]
        %v1079 = vld [vmem:[%s7 + $0x58] sm:$0xf]
        %v1080 = vld [vmem:[%s7 + $0x5c] sm:$0xf]
        %v1081 = vld [vmem:[%s7 + $0x60] sm:$0xf]
        %v1082 = vld [vmem:[%s7 + $0x64] sm:$0xf]
        %v1083 = vld [vmem:[%s7 + $0x68] sm:$0xf]
        %v1084 = vld [vmem:[%s7 + $0x6c] sm:$0xf]
        %v1085 = vld [vmem:[%s7 + $0x70] sm:$0xf]
        %v1086 = vld [vmem:[%s7 + $0x74] sm:$0xf]
        %v1087 = vld [vmem:[%s7 + $0x78] sm:$0xf]
        %v1088 = vld [vmem:[%s7 + $0x7c] sm:$0xf]
        %v1121 = vunpack.c.l.b16 %v1057
        %v1122 = vunpack.c.l.b16 %v1058
        %v1123 = vunpack.c.l.b16 %v1059
        %v1124 = vunpack.c.l.b16 %v1060
        %v1125 = vunpack.c.l.b16 %v1061
        %v1126 = vunpack.c.l.b16 %v1062
        %v1127 = vunpack.c.l.b16 %v1063
        %v1128 = vunpack.c.l.b16 %v1064
        %v1129 = vunpack.c.l.b16 %v1065
        %v1130 = vunpack.c.l.b16 %v1066
        %v1131 = vunpack.c.l.b16 %v1067
        %v1132 = vunpack.c.l.b16 %v1068
        %v1133 = vunpack.c.l.b16 %v1069
        %v1134 = vunpack.c.l.b16 %v1070
        %v1135 = vunpack.c.l.b16 %v1071
        %v1136 = vunpack.c.l.b16 %v1072
        %v1137 = vunpack.c.l.b16 %v1073
        %v1138 = vunpack.c.l.b16 %v1074
        %v1139 = vunpack.c.l.b16 %v1075
        %v1140 = vunpack.c.l.b16 %v1076
        %v1141 = vunpack.c.l.b16 %v1077
        %v1142 = vunpack.c.l.b16 %v1078
        %v1143 = vunpack.c.l.b16 %v1079
        %v1144 = vunpack.c.l.b16 %v1080
        %v1145 = vunpack.c.l.b16 %v1081
        %v1146 = vunpack.c.l.b16 %v1082
        %v1147 = vunpack.c.l.b16 %v1083
        %v1148 = vunpack.c.l.b16 %v1084
        %v1149 = vunpack.c.l.b16 %v1085
        %v1150 = vunpack.c.l.b16 %v1086
        %v1151 = vunpack.c.l.b16 %v1087
        %v1152 = vunpack.c.l.b16 %v1088
        %v1153 = vpack.c.b16 %v1122, %v1121
        %v1154 = vpack.c.b16 %v1124, %v1123
        %v1155 = vpack.c.b16 %v1126, %v1125
        %v1156 = vpack.c.b16 %v1128, %v1127
        %v1157 = vpack.c.b16 %v1130, %v1129
        %v1158 = vpack.c.b16 %v1132, %v1131
        %v1159 = vpack.c.b16 %v1134, %v1133
        %v1160 = vpack.c.b16 %v1136, %v1135
        %v1161 = vpack.c.b16 %v1138, %v1137
        %v1162 = vpack.c.b16 %v1140, %v1139
        %v1163 = vpack.c.b16 %v1142, %v1141
        %v1164 = vpack.c.b16 %v1144, %v1143
        %v1165 = vpack.c.b16 %v1146, %v1145
        %v1166 = vpack.c.b16 %v1148, %v1147
        %v1167 = vpack.c.b16 %v1150, %v1149
        %v1168 = vpack.c.b16 %v1152, %v1151
        %1185 = vmatprep.subr.bf16.mxu0 0
        %1186 = vmatpush1.bf16.msra.mxu0 %v1153
        %1187 = vmatprep.subr.bf16.mxu0 0
        %1188 = vmatpush1.bf16.msra.mxu0 %v1154
        %1189 = vmatprep.subr.bf16.mxu0 0
        %1190 = vmatpush1.bf16.msra.mxu0 %v1155
        %1191 = vmatprep.subr.bf16.mxu0 0
        %1192 = vmatpush1.bf16.msra.mxu0 %v1156
        %1193 = vmatprep.subr.bf16.mxu0 0
        %1194 = vmatpush1.bf16.msra.mxu0 %v1157
        %1195 = vmatprep.subr.bf16.mxu0 0
        %1196 = vmatpush1.bf16.msra.mxu0 %v1158
        %1197 = vmatprep.subr.bf16.mxu0 0
        %1198 = vmatpush1.bf16.msra.mxu0 %v1159
        %1199 = vmatprep.subr.bf16.mxu0 0
        %1200 = vmatpush1.bf16.msra.mxu0 %v1160
        %1201 = vmatprep.subr.bf16.mxu0 0
        %1202 = vmatpush1.bf16.msra.mxu0 %v1161
        %1203 = vmatprep.subr.bf16.mxu0 0
        %1204 = vmatpush1.bf16.msra.mxu0 %v1162
        %1205 = vmatprep.subr.bf16.mxu0 0
        %1206 = vmatpush1.bf16.msra.mxu0 %v1163
        %1207 = vmatprep.subr.bf16.mxu0 0
        %1208 = vmatpush1.bf16.msra.mxu0 %v1164
        %1209 = vmatprep.subr.bf16.mxu0 0
        %1210 = vmatpush1.bf16.msra.mxu0 %v1165
        %1211 = vmatprep.subr.bf16.mxu0 0
        %1212 = vmatpush1.bf16.msra.mxu0 %v1166
        %1213 = vmatprep.subr.bf16.mxu0 0
        %1214 = vmatpush1.bf16.msra.mxu0 %v1167
        %1215 = vmatprep.subr.bf16.mxu0 0
        %1216 = vmatpush1.bf16.msra.mxu0 %v1168
        %1217 = vmatprep.mubr.bf16.mxu0 %v1049
        %1218 = vmatmul.mubr.bf16.gmra.mrb[0].mxu0 %v999
        %v1219 = vpop.f32.mrb[0].mxu0
        %v1220 = vadd.f32 0.0, %v1219
        %v1221 = vpop.f32.mrb[0].mxu0
        %v1222 = vpop.f32.mrb[0].mxu0
        %v1223 = vadd.f32 0.0, %v1222
        %v1224 = vpop.f32.mrb[0].mxu0
        %1225 = vdwg.mxu0
        %v1226 = vsub.f32 %v1220, %v862
        %v1227 = vsub.f32 %v1223, %v863
        %1228 = vst.msk [vmem:[%s410] sm:$0xff] %vm463, %v1220
        %1229 = vst.msk [vmem:[%s410 + $0x8] sm:$0xff] %vm463, %v1223
        %vm1230 = vcmask 7168
        %v1231 = vsel %vm1230, %v978, %v1028
        %v1232 = vsel %vm1230, %v992, %v1042
        %1233 = vst.msk [vmem:[%s439] sm:$0xff] %vm596, %v1231
        %1234 = vst.msk [vmem:[%s439 + $0x8] sm:$0xff] %vm596, %v1232
        %vm1235 = vcmask 1040384
        %v1236 = vsel %vm1235, %v1006, %v1056
        %1237 = vst [vmem:[%s424] sm:$0x3] %v1236
        %v1238 = vmul.f32 %v1226, %v1226
        %v1239 = vmul.f32 %v1227, %v1227
        %v1240 = vsel %vm463, %v1238, 0.0
        %v1241 = vsel %vm463, %v1239, 0.0
        %v1242 = vadd.f32 %v1240, %v1241
        %1243 = vadd.xlane.f32.xlu0 %v1242
        %v1244 = vpop.xlane.xlu0 %1243
        %v1245 = vrot.slane %v1244, 4
        %v1246 = vadd.f32 %v1244, %v1245
        %v1247 = vrot.slane %v1246, 2
        %v1248 = vadd.f32 %v1246, %v1247
        %v1249 = vrot.slane %v1248, 1
        %v1250 = vadd.f32 %v1248, %v1249
        %s1251 = vtos %v1250
        %v1252 = vstv %s1251
        %vm1253 = vcmask 0
        %1254 = vst.msk [vmem:[%s442] sm:$0x1] %vm1253, %v1252
        %s1255 = sand.u32 %s232, 1
        %s1256 = scalar_lea.sflag [#allocation3], %s1255
        %s1257 = sand.u32 %s232, 1
        %s1258 = smul.addr %s1257, 16
        %s1259 = scalar_lea.vmem [#allocation2], %s1258
        %p1260 = scmp.lt.s32.totalorder %s30, 1
        %s1261 = scalar_select %p1260, %s30, 1
        %s1262 = smul.addr %s1261, 2
        %s1263 = smul.addr %s1262, 8
        %s1264 = scalar_lea.vmem %s10, %s1263
        %s1265 = sand.u32 %s284, 1
        %s1266 = scalar_lea.sflag [#allocation5], %s1265
        %s1267 = sand.u32 %s284, 1
        %s1268 = smul.addr %s1267, 2
        %s1269 = scalar_lea.vmem [#allocation4], %s1268
        %p1270 = scmp.lt.s32.totalorder %s30, 1
        %s1271 = scalar_select %p1270, %s30, 1
        %s1272 = scalar_lea.vmem %s12, %s1271
        // Predicated region
        $region57: #{tpu_custom_call.1} parent=55 // pred_check
          %p1273 = pneg %p242
        $region58: #{tpu_custom_call.1} parent=55 // pred_check_branch
          %1275 = sbr.rel (%p1273) target = $region60
        $region59: #{tpu_custom_call.1} parent=55 // pred_region
          %s1277 = ssub.s32 256, 256
          %1278 = vsyncadd %s1256, %s1277
          %s1279 = smul.addr %s30, 2
          %s1280 = smul.addr %s1279, 128
          %s1281 = scalar_lea.hbm %s9, %s1280
          %s1282 = sshll.u32 %s1259, 4
          %s1283 = int_to_ptr.vmem [resolvable:$true] %s1282
          %1288 = dma.vmem_to_hbm [thread:$0]  %s1283, 256, %s1281, %s1256, 128, 128, 8
        $region60: #{tpu_custom_call.1} parent=55 // pred_fallthru
          _
        // Predicated region
        $region61: #{tpu_custom_call.1} parent=55 // pred_check
          %p1289 = pneg %p268
        $region62: #{tpu_custom_call.1} parent=55 // pred_check_branch
          %1291 = sbr.rel (%p1289) target = $region64
        $region63: #{tpu_custom_call.1} parent=55 // pred_region
          _
        $region64: #{tpu_custom_call.1} parent=55 // pred_fallthru
          _
        // Predicated region
        $region65: #{tpu_custom_call.1} parent=55 // pred_check
          %p1292 = pneg %p294
        $region66: #{tpu_custom_call.1} parent=55 // pred_check_branch
          %1294 = sbr.rel (%p1292) target = $region68
        $region67: #{tpu_custom_call.1} parent=55 // pred_region
          %s1296 = ssub.s32 32, 32
          %1297 = vsyncadd %s1266, %s1296
          %s1298 = smul.addr %s30, 32
          %s1299 = scalar_lea.hbm %s11, %s1298
          %s1301 = sshll.u32 %s1269, 4
          %s1302 = int_to_ptr.vmem [resolvable:$true] %s1301
          %1304 = dma.vmem_to_hbm [thread:$0]  %s1302, 32, %s1299, %s1266
        $region68: #{tpu_custom_call.1} parent=55 // pred_fallthru
          _
        // Predicated region
        $region69: #{tpu_custom_call.1} parent=55 // pred_check
          %p1305 = pneg %p320
        $region70: #{tpu_custom_call.1} parent=55 // pred_check_branch
          %1307 = sbr.rel (%p1305) target = $region72
        $region71: #{tpu_custom_call.1} parent=55 // pred_region
          _
        $region72: #{tpu_custom_call.1} parent=55 // pred_fallthru
          _
      $region56: #{tpu_custom_call.1} parent=5 // pred_fallthru
        _
      %p1308 = scmp.le.s32.totalorder 2, %s25
      // Predicated region
      $region73: #{tpu_custom_call.1} parent=5 // pred_check
        %p1309 = pneg %p1308
      $region74: #{tpu_custom_call.1} parent=5 // pred_check_branch
        %1311 = sbr.rel (%p1309) target = $region76
      $region75: #{tpu_custom_call.1} parent=5 // pred_region
        %s1312 = ssub.s32 %s25, 2
        // Predicated region
        $region77: #{tpu_custom_call.1} parent=75 // pred_check
          %p1313 = pneg %p248
        $region78: #{tpu_custom_call.1} parent=75 // pred_check_branch
          %1315 = sbr.rel (%p1313) target = $region80
        $region79: #{tpu_custom_call.1} parent=75 // pred_region
          %s1316 = sand.u32 %s233, 1
          %s1317 = scalar_lea.sflag [#allocation3], %s1316
          %s1318 = sand.u32 %s233, 1
          %s1319 = smul.addr %s1318, 16
          %s1320 = scalar_lea.vmem [#allocation2], %s1319
          %1321 = dma.done %s1317, 256
        $region80: #{tpu_custom_call.1} parent=75 // pred_fallthru
          _
        // Predicated region
        $region81: #{tpu_custom_call.1} parent=75 // pred_check
          %p1322 = pneg %p274
        $region82: #{tpu_custom_call.1} parent=75 // pred_check_branch
          %1324 = sbr.rel (%p1322) target = $region84
        $region83: #{tpu_custom_call.1} parent=75 // pred_region
          %p1325 = scmp.lt.s32.totalorder %s31, 1
          %s1326 = scalar_select %p1325, %s31, 1
          %s1327 = smul.addr %s1326, 2
          %s1328 = smul.addr %s1327, 8
          %s1329 = scalar_lea.vmem %s10, %s1328
        $region84: #{tpu_custom_call.1} parent=75 // pred_fallthru
          _
        // Predicated region
        $region85: #{tpu_custom_call.1} parent=75 // pred_check
          %p1330 = pneg %p300
        $region86: #{tpu_custom_call.1} parent=75 // pred_check_branch
          %1332 = sbr.rel (%p1330) target = $region88
        $region87: #{tpu_custom_call.1} parent=75 // pred_region
          %s1333 = sand.u32 %s285, 1
          %s1334 = scalar_lea.sflag [#allocation5], %s1333
          %s1335 = sand.u32 %s285, 1
          %s1336 = smul.addr %s1335, 2
          %s1337 = scalar_lea.vmem [#allocation4], %s1336
          %1338 = dma.done %s1334, 32
        $region88: #{tpu_custom_call.1} parent=75 // pred_fallthru
          _
        // Predicated region
        $region89: #{tpu_custom_call.1} parent=75 // pred_check
          %p1339 = pneg %p326
        $region90: #{tpu_custom_call.1} parent=75 // pred_check_branch
          %1341 = sbr.rel (%p1339) target = $region92
        $region91: #{tpu_custom_call.1} parent=75 // pred_region
          %p1342 = scmp.lt.s32.totalorder %s31, 1
          %s1343 = scalar_select %p1342, %s31, 1
          %s1344 = scalar_lea.vmem %s12, %s1343
        $region92: #{tpu_custom_call.1} parent=75 // pred_fallthru
          _
      $region76: #{tpu_custom_call.1} parent=5 // pred_fallthru
        _
    $region6: #{tpu_custom_call.1} parent=1 // loop_footer
      %s29 = sadd.s32 1, %s25
    $region7: #{tpu_custom_call.1} parent=1 // loop_footer_branch
      %24 = sbr.rel target = $region3
    $region8: #{tpu_custom_call.1} parent=1 // loop_exit
      _
    %1345 = vsyncpa [#allocation3], 1
    %s1346 = scalar_lea.sflag [#allocation3], 1
    %1347 = vsyncpa %s1346, 1
    %1348 = vsyncpa [#allocation5], 1
    %s1349 = scalar_lea.sflag [#allocation5], 1
    %1350 = vsyncpa %s1349, 1

</llo_original>
